<compile_context>
chip_gen: v7x
topology: tpu7x:2x2x1
jax: 0.10.0
libtpu: 0.0.40
codegen_flags: <defaults>
</compile_context>

<pallas_src>
import jax
import jax.numpy as jnp
from jax.experimental import pallas as pl
from jax.experimental.pallas import tpu as pltpu


# ----------------------------------------------------------------------------
# Fused Pallas kernel: the entire forward pass in one invocation
# ----------------------------------------------------------------------------

def _fused_forward_kernel(ctx_ref,        # (T, B, N, N)  context event streams
                          curr_ref,       # (B, N, N)     current event stream
                          ctx_emb_ref,    # (N, E)        ctx encoder node table
                          cur_emb_ref,    # (N, E)        curr encoder node table
                          w_enc_ctx_ref,  # (2E, 2E)      blockdiag(Wr, Wc) ctx
                          b_enc_ctx_ref,  # (1, 2E)
                          w_enc_cur_ref,  # (2E, 2E)      blockdiag(Wr, Wc) curr
                          b_enc_cur_ref,  # (1, 2E)
                          w_rnn_ref,      # (4E, 2E)      [blockdiag(Wih); blockdiag(Whh)]
                          b_rnn_ref,      # (1, 2E)
                          h0_ref,         # (B*N, 2E)     packed [row|col] init hidden
                          w_rep_ref,      # (4E, 2R)      packed rep projection
                          b_rep_ref,      # (1, 2R)
                          gamma_ref,      # (1, 2R)
                          beta_ref,       # (1, 2R)
                          out_ref):       # (B, N, N)     recovered adjacency
    T, B, N, _ = ctx_ref.shape
    E = ctx_emb_ref.shape[1]
    R = w_rep_ref.shape[1] // 2
    f32 = jnp.float32

    # Weights / tables: loaded once, live in vregs/VMEM for the whole kernel.
    ctx_emb = ctx_emb_ref[...]
    cur_emb = cur_emb_ref[...]
    w_enc_ctx = w_enc_ctx_ref[...]
    b_enc_ctx = b_enc_ctx_ref[...]
    w_enc_cur = w_enc_cur_ref[...]
    b_enc_cur = b_enc_cur_ref[...]
    w_rnn = w_rnn_ref[...]
    b_rnn = b_rnn_ref[...]
    w_rep = w_rep_ref[...]
    b_rep = b_rep_ref[...]
    gamma = gamma_ref[...]
    beta = beta_ref[...]

    def encode(adj, emb, w_enc, b_enc):
        """Perm-invariant encoder; batch folded into rows, row/col packed on lanes."""
        # adj: (B, N, N).  Row aggregation for all batches in one matmul,
        # column aggregation via per-batch 2-D transpose (XLU, off critical path).
        adj_rows = jnp.concatenate([adj[b] for b in range(B)], axis=0)      # (B*N, N)
        adj_cols = jnp.concatenate([adj[b].T for b in range(B)], axis=0)    # (B*N, N)
        agg = jnp.concatenate(
            [jnp.dot(adj_rows, emb, preferred_element_type=f32),
             jnp.dot(adj_cols, emb, preferred_element_type=f32)], axis=-1)  # (B*N, 2E)
        # block-diagonal weight applies Wr to the row half, Wc to the col half.
        return jnp.tanh(jnp.dot(agg, w_enc, preferred_element_type=f32) + b_enc)

    def rnn_step(x, h):
        """Both StructuredRNN paths in one matmul: [x|h] @ [Wih; Whh] (block-diag)."""
        xh = jnp.concatenate([x, h], axis=-1)                               # (B*N, 4E)
        return jnp.tanh(jnp.dot(xh, w_rnn, preferred_element_type=f32) + b_rnn)

    # ---- offline stage: encode each context stream, run the recurrence ----
    hidden = h0_ref[...]                                                    # (B*N, 2E)
    for t in range(T):   # T is static; tiny trip count, fully unrolled at trace time
        x_t = encode(ctx_ref[t], ctx_emb, w_enc_ctx, b_enc_ctx)
        hidden = rnn_step(x_t, hidden)

    # ---- online stage: encode the current stream ----
    stream = encode(curr_ref[...], cur_emb, w_enc_cur, b_enc_cur)           # (B*N, 2E)

    # ---- decoder stage: LNLayer reps + sigmoid(bmm) ----
    # feat = [row_hidden | col_hidden | stream_row | stream_col]   (B*N, 4E)
    feat = jnp.concatenate([hidden, stream], axis=-1)
    y = jnp.dot(feat, w_rep, preferred_element_type=f32) + b_rep            # (B*N, 2R)

    def layer_norm(v, g, bt):
        mean = jnp.mean(v, axis=-1, keepdims=True)
        c = v - mean
        var = jnp.mean(c * c, axis=-1, keepdims=True)
        return c * jax.lax.rsqrt(var + 1e-5) * g + bt

    row_rep = layer_norm(y[:, :R], gamma[:, :R], beta[:, :R])               # (B*N, R)
    col_rep = layer_norm(y[:, R:], gamma[:, R:], beta[:, R:])               # (B*N, R)

    # recover[b] = sigmoid(row_rep[b] @ col_rep[b]^T)
    for b in range(B):
        r = row_rep[b * N:(b + 1) * N, :]                                   # (N, R)
        c = col_rep[b * N:(b + 1) * N, :]                                   # (N, R)
        scores = jnp.dot(r, c.T, preferred_element_type=f32)                # (N, N)
        out_ref[b] = jax.nn.sigmoid(scores)

    # TODO(synk): stageTimes (host-side time.time bookkeeping) is telemetry and
    # is not reproduced inside the kernel.


# ----------------------------------------------------------------------------
# Parameter init (PyTorch-module-shaped) and packing for the fused kernel
# ----------------------------------------------------------------------------

def _glorot(key, shape):
    fan_in, fan_out = shape[0], shape[-1]
    lim = (6.0 / (fan_in + fan_out)) ** 0.5
    return jax.random.uniform(key, shape, jnp.float32, -lim, lim)


def init_params(key, num_nodes, embed_dim, rank):
    ks = jax.random.split(key, 16)
    E, N, R = embed_dim, num_nodes, rank
    p = {}
    # StructuredRNN (row / col)
    p["row_wih"] = _glorot(ks[0], (E, E))
    p["row_whh"] = _glorot(ks[1], (E, E))
    p["row_b"] = jnp.zeros((1, E), jnp.float32)
    p["col_wih"] = _glorot(ks[2], (E, E))
    p["col_whh"] = _glorot(ks[3], (E, E))
    p["col_b"] = jnp.zeros((1, E), jnp.float32)
    # Init hidden embedding tables
    p["row_init_hidden"] = 0.02 * jax.random.normal(ks[4], (N, E), jnp.float32)
    p["col_init_hidden"] = 0.02 * jax.random.normal(ks[5], (N, E), jnp.float32)
    # LNLayer (row / col rep)
    p["row_rep_w"] = _glorot(ks[6], (2 * E, R))
    p["row_rep_b"] = jnp.zeros((1, R), jnp.float32)
    p["row_rep_gamma"] = jnp.ones((1, R), jnp.float32)
    p["row_rep_beta"] = jnp.zeros((1, R), jnp.float32)
    p["col_rep_w"] = _glorot(ks[7], (2 * E, R))
    p["col_rep_b"] = jnp.zeros((1, R), jnp.float32)
    p["col_rep_gamma"] = jnp.ones((1, R), jnp.float32)
    p["col_rep_beta"] = jnp.zeros((1, R), jnp.float32)
    # PermInvarEventEncoder (ctx / curr)
    p["ctx_emb"] = 0.02 * jax.random.normal(ks[8], (N, E), jnp.float32)
    p["ctx_wr"] = _glorot(ks[9], (E, E))
    p["ctx_br"] = jnp.zeros((1, E), jnp.float32)
    p["ctx_wc"] = _glorot(ks[10], (E, E))
    p["ctx_bc"] = jnp.zeros((1, E), jnp.float32)
    p["cur_emb"] = 0.02 * jax.random.normal(ks[11], (N, E), jnp.float32)
    p["cur_wr"] = _glorot(ks[12], (E, E))
    p["cur_br"] = jnp.zeros((1, E), jnp.float32)
    p["cur_wc"] = _glorot(ks[13], (E, E))
    p["cur_bc"] = jnp.zeros((1, E), jnp.float32)
    return p


def _block_diag(a, b):
    za = jnp.zeros((a.shape[0], b.shape[1]), a.dtype)
    zb = jnp.zeros((b.shape[0], a.shape[1]), b.dtype)
    return jnp.concatenate(
        [jnp.concatenate([a, za], axis=1),
         jnp.concatenate([zb, b], axis=1)], axis=0)


def pack_params(p):
    """Pack row/col paths into block-diagonal weights (done once, off-device-hot-path)."""
    E = p["row_wih"].shape[0]
    packed = {
        "ctx_emb": p["ctx_emb"],
        "cur_emb": p["cur_emb"],
        # encoders: agg = [row_agg | col_agg] -> @ blockdiag(Wr, Wc)
        "w_enc_ctx": _block_diag(p["ctx_wr"], p["ctx_wc"]),
        "b_enc_ctx": jnp.concatenate([p["ctx_br"], p["ctx_bc"]], axis=-1),
        "w_enc_cur": _block_diag(p["cur_wr"], p["cur_wc"]),
        "b_enc_cur": jnp.concatenate([p["cur_br"], p["cur_bc"]], axis=-1),
        # RNN: [x_row|x_col|h_row|h_col] @ [blockdiag(Wih); blockdiag(Whh)]
        "w_rnn": jnp.concatenate(
            [_block_diag(p["row_wih"], p["col_wih"]),
             _block_diag(p["row_whh"], p["col_whh"])], axis=0),
        "b_rnn": jnp.concatenate([p["row_b"], p["col_b"]], axis=-1),
        # init hidden packed [row | col] along features
        "init_hidden": jnp.concatenate(
            [p["row_init_hidden"], p["col_init_hidden"]], axis=-1),
        # rep projection: feat = [h_row|h_col|s_row|s_col]
        "w_rep": jnp.concatenate(
            [_block_diag(p["row_rep_w"][:E], p["col_rep_w"][:E]),
             _block_diag(p["row_rep_w"][E:], p["col_rep_w"][E:])], axis=0),
        "b_rep": jnp.concatenate([p["row_rep_b"], p["col_rep_b"]], axis=-1),
        "gamma": jnp.concatenate([p["row_rep_gamma"], p["col_rep_gamma"]], axis=-1),
        "beta": jnp.concatenate([p["row_rep_beta"], p["col_rep_beta"]], axis=-1),
    }
    return packed


# ----------------------------------------------------------------------------
# Forward: one fused pallas_call
# ----------------------------------------------------------------------------

@jax.jit
def resnmmf_forward(packed, ctx_streams, curr_streams):
    """ctx_streams: (T, B, N, N); curr_streams: (B, N, N) -> recover (B, N, N)."""
    T, B, N, _ = ctx_streams.shape
    twoE = packed["init_hidden"].shape[1]

    # hidden_idx = [range(N)] * B  ==>  gather == broadcast of the table
    h0 = jnp.broadcast_to(packed["init_hidden"][None], (B, N, twoE))
    h0 = h0.reshape(B * N, twoE)

    return pl.pallas_call(
        _fused_forward_kernel,
        out_shape=jax.ShapeDtypeStruct((B, N, N), jnp.float32),
    )(ctx_streams, curr_streams,
      packed["ctx_emb"], packed["cur_emb"],
      packed["w_enc_ctx"], packed["b_enc_ctx"],
      packed["w_enc_cur"], packed["b_enc_cur"],
      packed["w_rnn"], packed["b_rnn"], h0,
      packed["w_rep"], packed["b_rep"], packed["gamma"], packed["beta"])


# ----------------------------------------------------------------------------
# Main
# ----------------------------------------------------------------------------

if __name__ == "__main__":
    NUM_NODES = 8
    EMBED_DIM = 16
    RANK = 8
    BATCH = 2
    N_CTX = 3

    key = jax.random.PRNGKey(0)
    k_in, k_cur, k_par = jax.random.split(key, 3)

    # Event streams as dense per-batch adjacency matrices in {0, 1}.
    ctx_streams = (jax.random.uniform(
        k_in, (N_CTX, BATCH, NUM_NODES, NUM_NODES), jnp.float32) > 0.5
    ).astype(jnp.float32)
    curr_streams = (jax.random.uniform(
        k_cur, (BATCH, NUM_NODES, NUM_NODES), jnp.float32) > 0.5
    ).astype(jnp.float32)

    params = init_params(k_par, NUM_NODES, EMBED_DIM, RANK)
    packed = jax.tree_util.tree_map(jnp.asarray, pack_params(params))

    recover = resnmmf_forward(packed, ctx_streams, curr_streams)
    recover = jax.block_until_ready(recover)

    assert recover.shape == (BATCH, NUM_NODES, NUM_NODES), recover.shape
    assert bool(jnp.all(jnp.isfinite(recover)))
    assert bool(jnp.all((recover >= 0.0) & (recover <= 1.0)))

    print("KERNEL_OK")
</pallas_src>

<mosaic_0001>
module attributes {stable_mosaic.version = 11 : i64} {
  func.func @_fused_forward_kernel(%arg0: memref<3x2x8x8xf32, #tpu.memory_space<vmem>>, %arg1: memref<2x8x8xf32, #tpu.memory_space<vmem>>, %arg2: memref<8x16xf32, #tpu.memory_space<vmem>>, %arg3: memref<8x16xf32, #tpu.memory_space<vmem>>, %arg4: memref<32x32xf32, #tpu.memory_space<vmem>>, %arg5: memref<1x32xf32, #tpu.memory_space<vmem>>, %arg6: memref<32x32xf32, #tpu.memory_space<vmem>>, %arg7: memref<1x32xf32, #tpu.memory_space<vmem>>, %arg8: memref<64x32xf32, #tpu.memory_space<vmem>>, %arg9: memref<1x32xf32, #tpu.memory_space<vmem>>, %arg10: memref<16x32xf32, #tpu.memory_space<vmem>>, %arg11: memref<64x16xf32, #tpu.memory_space<vmem>>, %arg12: memref<1x16xf32, #tpu.memory_space<vmem>>, %arg13: memref<1x16xf32, #tpu.memory_space<vmem>>, %arg14: memref<1x16xf32, #tpu.memory_space<vmem>>, %arg15: memref<2x8x8xf32, #tpu.memory_space<vmem>>) attributes {dimension_semantics = [], scalar_prefetch = 0 : i64, scratch_operands = 0 : i64, tpu.core_type = #tpu.core_type<tc>} {
    %c0 = arith.constant 0 : index
    %c0_0 = arith.constant 0 : index
    %0 = vector.load %arg2[%c0, %c0_0] : memref<8x16xf32, #tpu.memory_space<vmem>>, vector<8x16xf32>
    %c0_1 = arith.constant 0 : index
    %c0_2 = arith.constant 0 : index
    %1 = vector.load %arg3[%c0_1, %c0_2] : memref<8x16xf32, #tpu.memory_space<vmem>>, vector<8x16xf32>
    %c0_3 = arith.constant 0 : index
    %c0_4 = arith.constant 0 : index
    %2 = vector.load %arg4[%c0_3, %c0_4] : memref<32x32xf32, #tpu.memory_space<vmem>>, vector<32x32xf32>
    %c0_5 = arith.constant 0 : index
    %c0_6 = arith.constant 0 : index
    %3 = vector.load %arg5[%c0_5, %c0_6] : memref<1x32xf32, #tpu.memory_space<vmem>>, vector<1x32xf32>
    %c0_7 = arith.constant 0 : index
    %c0_8 = arith.constant 0 : index
    %4 = vector.load %arg6[%c0_7, %c0_8] : memref<32x32xf32, #tpu.memory_space<vmem>>, vector<32x32xf32>
    %c0_9 = arith.constant 0 : index
    %c0_10 = arith.constant 0 : index
    %5 = vector.load %arg7[%c0_9, %c0_10] : memref<1x32xf32, #tpu.memory_space<vmem>>, vector<1x32xf32>
    %c0_11 = arith.constant 0 : index
    %c0_12 = arith.constant 0 : index
    %6 = vector.load %arg8[%c0_11, %c0_12] : memref<64x32xf32, #tpu.memory_space<vmem>>, vector<64x32xf32>
    %c0_13 = arith.constant 0 : index
    %c0_14 = arith.constant 0 : index
    %7 = vector.load %arg9[%c0_13, %c0_14] : memref<1x32xf32, #tpu.memory_space<vmem>>, vector<1x32xf32>
    %c0_15 = arith.constant 0 : index
    %c0_16 = arith.constant 0 : index
    %8 = vector.load %arg11[%c0_15, %c0_16] : memref<64x16xf32, #tpu.memory_space<vmem>>, vector<64x16xf32>
    %c0_17 = arith.constant 0 : index
    %c0_18 = arith.constant 0 : index
    %9 = vector.load %arg12[%c0_17, %c0_18] : memref<1x16xf32, #tpu.memory_space<vmem>>, vector<1x16xf32>
    %c0_19 = arith.constant 0 : index
    %c0_20 = arith.constant 0 : index
    %10 = vector.load %arg13[%c0_19, %c0_20] : memref<1x16xf32, #tpu.memory_space<vmem>>, vector<1x16xf32>
    %c0_21 = arith.constant 0 : index
    %c0_22 = arith.constant 0 : index
    %11 = vector.load %arg14[%c0_21, %c0_22] : memref<1x16xf32, #tpu.memory_space<vmem>>, vector<1x16xf32>
    %c0_23 = arith.constant 0 : index
    %c0_24 = arith.constant 0 : index
    %12 = vector.load %arg10[%c0_23, %c0_24] : memref<16x32xf32, #tpu.memory_space<vmem>>, vector<16x32xf32>
    %c0_25 = arith.constant 0 : index
    %c0_26 = arith.constant 0 : index
    %c0_27 = arith.constant 0 : index
    %c0_28 = arith.constant 0 : index
    %13 = vector.load %arg0[%c0_25, %c0_26, %c0_27, %c0_28] : memref<3x2x8x8xf32, #tpu.memory_space<vmem>>, vector<1x2x8x8xf32>
    %14 = vector.shape_cast %13 : vector<1x2x8x8xf32> to vector<2x8x8xf32>
    %15 = vector.extract_strided_slice %14 {offsets = [0, 0, 0], sizes = [1, 8, 8], strides = [1, 1, 1]} : vector<2x8x8xf32> to vector<1x8x8xf32>
    %16 = vector.shape_cast %15 : vector<1x8x8xf32> to vector<8x8xf32>
    %17 = vector.extract_strided_slice %14 {offsets = [1, 0, 0], sizes = [1, 8, 8], strides = [1, 1, 1]} : vector<2x8x8xf32> to vector<1x8x8xf32>
    %18 = vector.shape_cast %17 : vector<1x8x8xf32> to vector<8x8xf32>
    %19 = tpu.concatenate %16, %18 in 0 : vector<8x8xf32>, vector<8x8xf32> -> vector<16x8xf32>
    %20 = vector.extract_strided_slice %14 {offsets = [0, 0, 0], sizes = [1, 8, 8], strides = [1, 1, 1]} : vector<2x8x8xf32> to vector<1x8x8xf32>
    %21 = vector.shape_cast %20 : vector<1x8x8xf32> to vector<8x8xf32>
    %22 = tpu.transpose %21, [1, 0] : vector<8x8xf32> -> vector<8x8xf32>
    %23 = vector.extract_strided_slice %14 {offsets = [1, 0, 0], sizes = [1, 8, 8], strides = [1, 1, 1]} : vector<2x8x8xf32> to vector<1x8x8xf32>
    %24 = vector.shape_cast %23 : vector<1x8x8xf32> to vector<8x8xf32>
    %25 = tpu.transpose %24, [1, 0] : vector<8x8xf32> -> vector<8x8xf32>
    %26 = tpu.concatenate %22, %25 in 0 : vector<8x8xf32>, vector<8x8xf32> -> vector<16x8xf32>
    %cst = arith.constant dense<0.000000e+00> : vector<16x16xf32>
    %27 = tpu.matmul %19, %0, %cst {dimension_numbers = #tpu.dot_dimension_numbers<[1], [0], [0], [1], [0, 0, 1, 1], [], []>} : vector<16x8xf32>, vector<8x16xf32>, vector<16x16xf32> -> vector<16x16xf32>
    %cst_29 = arith.constant dense<0.000000e+00> : vector<16x16xf32>
    %28 = tpu.matmul %26, %0, %cst_29 {dimension_numbers = #tpu.dot_dimension_numbers<[1], [0], [0], [1], [0, 0, 1, 1], [], []>} : vector<16x8xf32>, vector<8x16xf32>, vector<16x16xf32> -> vector<16x16xf32>
    %29 = tpu.concatenate %27, %28 in 1 : vector<16x16xf32>, vector<16x16xf32> -> vector<16x32xf32>
    %cst_30 = arith.constant dense<0.000000e+00> : vector<16x32xf32>
    %30 = tpu.matmul %29, %2, %cst_30 {dimension_numbers = #tpu.dot_dimension_numbers<[1], [0], [0], [1], [0, 0, 1, 1], [], []>} : vector<16x32xf32>, vector<32x32xf32>, vector<16x32xf32> -> vector<16x32xf32>
    %31 = vector.broadcast %3 : vector<1x32xf32> to vector<16x32xf32>
    %32 = arith.addf %30, %31 : vector<16x32xf32>
    %33 = math.tanh %32 : vector<16x32xf32>
    %34 = tpu.concatenate %33, %12 in 1 : vector<16x32xf32>, vector<16x32xf32> -> vector<16x64xf32>
    %cst_31 = arith.constant dense<0.000000e+00> : vector<16x32xf32>
    %35 = tpu.matmul %34, %6, %cst_31 {dimension_numbers = #tpu.dot_dimension_numbers<[1], [0], [0], [1], [0, 0, 1, 1], [], []>} : vector<16x64xf32>, vector<64x32xf32>, vector<16x32xf32> -> vector<16x32xf32>
    %36 = vector.broadcast %7 : vector<1x32xf32> to vector<16x32xf32>
    %37 = arith.addf %35, %36 : vector<16x32xf32>
    %38 = math.tanh %37 : vector<16x32xf32>
    %c1 = arith.constant 1 : index
    %c0_32 = arith.constant 0 : index
    %c0_33 = arith.constant 0 : index
    %c0_34 = arith.constant 0 : index
    %39 = vector.load %arg0[%c1, %c0_32, %c0_33, %c0_34] : memref<3x2x8x8xf32, #tpu.memory_space<vmem>>, vector<1x2x8x8xf32>
    %40 = vector.shape_cast %39 : vector<1x2x8x8xf32> to vector<2x8x8xf32>
    %41 = vector.extract_strided_slice %40 {offsets = [0, 0, 0], sizes = [1, 8, 8], strides = [1, 1, 1]} : vector<2x8x8xf32> to vector<1x8x8xf32>
    %42 = vector.shape_cast %41 : vector<1x8x8xf32> to vector<8x8xf32>
    %43 = vector.extract_strided_slice %40 {offsets = [1, 0, 0], sizes = [1, 8, 8], strides = [1, 1, 1]} : vector<2x8x8xf32> to vector<1x8x8xf32>
    %44 = vector.shape_cast %43 : vector<1x8x8xf32> to vector<8x8xf32>
    %45 = tpu.concatenate %42, %44 in 0 : vector<8x8xf32>, vector<8x8xf32> -> vector<16x8xf32>
    %46 = vector.extract_strided_slice %40 {offsets = [0, 0, 0], sizes = [1, 8, 8], strides = [1, 1, 1]} : vector<2x8x8xf32> to vector<1x8x8xf32>
    %47 = vector.shape_cast %46 : vector<1x8x8xf32> to vector<8x8xf32>
    %48 = tpu.transpose %47, [1, 0] : vector<8x8xf32> -> vector<8x8xf32>
    %49 = vector.extract_strided_slice %40 {offsets = [1, 0, 0], sizes = [1, 8, 8], strides = [1, 1, 1]} : vector<2x8x8xf32> to vector<1x8x8xf32>
    %50 = vector.shape_cast %49 : vector<1x8x8xf32> to vector<8x8xf32>
    %51 = tpu.transpose %50, [1, 0] : vector<8x8xf32> -> vector<8x8xf32>
    %52 = tpu.concatenate %48, %51 in 0 : vector<8x8xf32>, vector<8x8xf32> -> vector<16x8xf32>
    %cst_35 = arith.constant dense<0.000000e+00> : vector<16x16xf32>
    %53 = tpu.matmul %45, %0, %cst_35 {dimension_numbers = #tpu.dot_dimension_numbers<[1], [0], [0], [1], [0, 0, 1, 1], [], []>} : vector<16x8xf32>, vector<8x16xf32>, vector<16x16xf32> -> vector<16x16xf32>
    %cst_36 = arith.constant dense<0.000000e+00> : vector<16x16xf32>
    %54 = tpu.matmul %52, %0, %cst_36 {dimension_numbers = #tpu.dot_dimension_numbers<[1], [0], [0], [1], [0, 0, 1, 1], [], []>} : vector<16x8xf32>, vector<8x16xf32>, vector<16x16xf32> -> vector<16x16xf32>
    %55 = tpu.concatenate %53, %54 in 1 : vector<16x16xf32>, vector<16x16xf32> -> vector<16x32xf32>
    %cst_37 = arith.constant dense<0.000000e+00> : vector<16x32xf32>
    %56 = tpu.matmul %55, %2, %cst_37 {dimension_numbers = #tpu.dot_dimension_numbers<[1], [0], [0], [1], [0, 0, 1, 1], [], []>} : vector<16x32xf32>, vector<32x32xf32>, vector<16x32xf32> -> vector<16x32xf32>
    %57 = vector.broadcast %3 : vector<1x32xf32> to vector<16x32xf32>
    %58 = arith.addf %56, %57 : vector<16x32xf32>
    %59 = math.tanh %58 : vector<16x32xf32>
    %60 = tpu.concatenate %59, %38 in 1 : vector<16x32xf32>, vector<16x32xf32> -> vector<16x64xf32>
    %cst_38 = arith.constant dense<0.000000e+00> : vector<16x32xf32>
    %61 = tpu.matmul %60, %6, %cst_38 {dimension_numbers = #tpu.dot_dimension_numbers<[1], [0], [0], [1], [0, 0, 1, 1], [], []>} : vector<16x64xf32>, vector<64x32xf32>, vector<16x32xf32> -> vector<16x32xf32>
    %62 = vector.broadcast %7 : vector<1x32xf32> to vector<16x32xf32>
    %63 = arith.addf %61, %62 : vector<16x32xf32>
    %64 = math.tanh %63 : vector<16x32xf32>
    %c2 = arith.constant 2 : index
    %c0_39 = arith.constant 0 : index
    %c0_40 = arith.constant 0 : index
    %c0_41 = arith.constant 0 : index
    %65 = vector.load %arg0[%c2, %c0_39, %c0_40, %c0_41] : memref<3x2x8x8xf32, #tpu.memory_space<vmem>>, vector<1x2x8x8xf32>
    %66 = vector.shape_cast %65 : vector<1x2x8x8xf32> to vector<2x8x8xf32>
    %67 = vector.extract_strided_slice %66 {offsets = [0, 0, 0], sizes = [1, 8, 8], strides = [1, 1, 1]} : vector<2x8x8xf32> to vector<1x8x8xf32>
    %68 = vector.shape_cast %67 : vector<1x8x8xf32> to vector<8x8xf32>
    %69 = vector.extract_strided_slice %66 {offsets = [1, 0, 0], sizes = [1, 8, 8], strides = [1, 1, 1]} : vector<2x8x8xf32> to vector<1x8x8xf32>
    %70 = vector.shape_cast %69 : vector<1x8x8xf32> to vector<8x8xf32>
    %71 = tpu.concatenate %68, %70 in 0 : vector<8x8xf32>, vector<8x8xf32> -> vector<16x8xf32>
    %72 = vector.extract_strided_slice %66 {offsets = [0, 0, 0], sizes = [1, 8, 8], strides = [1, 1, 1]} : vector<2x8x8xf32> to vector<1x8x8xf32>
    %73 = vector.shape_cast %72 : vector<1x8x8xf32> to vector<8x8xf32>
    %74 = tpu.transpose %73, [1, 0] : vector<8x8xf32> -> vector<8x8xf32>
    %75 = vector.extract_strided_slice %66 {offsets = [1, 0, 0], sizes = [1, 8, 8], strides = [1, 1, 1]} : vector<2x8x8xf32> to vector<1x8x8xf32>
    %76 = vector.shape_cast %75 : vector<1x8x8xf32> to vector<8x8xf32>
    %77 = tpu.transpose %76, [1, 0] : vector<8x8xf32> -> vector<8x8xf32>
    %78 = tpu.concatenate %74, %77 in 0 : vector<8x8xf32>, vector<8x8xf32> -> vector<16x8xf32>
    %cst_42 = arith.constant dense<0.000000e+00> : vector<16x16xf32>
    %79 = tpu.matmul %71, %0, %cst_42 {dimension_numbers = #tpu.dot_dimension_numbers<[1], [0], [0], [1], [0, 0, 1, 1], [], []>} : vector<16x8xf32>, vector<8x16xf32>, vector<16x16xf32> -> vector<16x16xf32>
    %cst_43 = arith.constant dense<0.000000e+00> : vector<16x16xf32>
    %80 = tpu.matmul %78, %0, %cst_43 {dimension_numbers = #tpu.dot_dimension_numbers<[1], [0], [0], [1], [0, 0, 1, 1], [], []>} : vector<16x8xf32>, vector<8x16xf32>, vector<16x16xf32> -> vector<16x16xf32>
    %81 = tpu.concatenate %79, %80 in 1 : vector<16x16xf32>, vector<16x16xf32> -> vector<16x32xf32>
    %cst_44 = arith.constant dense<0.000000e+00> : vector<16x32xf32>
    %82 = tpu.matmul %81, %2, %cst_44 {dimension_numbers = #tpu.dot_dimension_numbers<[1], [0], [0], [1], [0, 0, 1, 1], [], []>} : vector<16x32xf32>, vector<32x32xf32>, vector<16x32xf32> -> vector<16x32xf32>
    %83 = vector.broadcast %3 : vector<1x32xf32> to vector<16x32xf32>
    %84 = arith.addf %82, %83 : vector<16x32xf32>
    %85 = math.tanh %84 : vector<16x32xf32>
    %86 = tpu.concatenate %85, %64 in 1 : vector<16x32xf32>, vector<16x32xf32> -> vector<16x64xf32>
    %cst_45 = arith.constant dense<0.000000e+00> : vector<16x32xf32>
    %87 = tpu.matmul %86, %6, %cst_45 {dimension_numbers = #tpu.dot_dimension_numbers<[1], [0], [0], [1], [0, 0, 1, 1], [], []>} : vector<16x64xf32>, vector<64x32xf32>, vector<16x32xf32> -> vector<16x32xf32>
    %88 = vector.broadcast %7 : vector<1x32xf32> to vector<16x32xf32>
    %89 = arith.addf %87, %88 : vector<16x32xf32>
    %90 = math.tanh %89 : vector<16x32xf32>
    %c0_46 = arith.constant 0 : index
    %c0_47 = arith.constant 0 : index
    %c0_48 = arith.constant 0 : index
    %91 = vector.load %arg1[%c0_46, %c0_47, %c0_48] : memref<2x8x8xf32, #tpu.memory_space<vmem>>, vector<2x8x8xf32>
    %92 = vector.extract_strided_slice %91 {offsets = [0, 0, 0], sizes = [1, 8, 8], strides = [1, 1, 1]} : vector<2x8x8xf32> to vector<1x8x8xf32>
    %93 = vector.shape_cast %92 : vector<1x8x8xf32> to vector<8x8xf32>
    %94 = vector.extract_strided_slice %91 {offsets = [1, 0, 0], sizes = [1, 8, 8], strides = [1, 1, 1]} : vector<2x8x8xf32> to vector<1x8x8xf32>
    %95 = vector.shape_cast %94 : vector<1x8x8xf32> to vector<8x8xf32>
    %96 = tpu.concatenate %93, %95 in 0 : vector<8x8xf32>, vector<8x8xf32> -> vector<16x8xf32>
    %97 = vector.extract_strided_slice %91 {offsets = [0, 0, 0], sizes = [1, 8, 8], strides = [1, 1, 1]} : vector<2x8x8xf32> to vector<1x8x8xf32>
    %98 = vector.shape_cast %97 : vector<1x8x8xf32> to vector<8x8xf32>
    %99 = tpu.transpose %98, [1, 0] : vector<8x8xf32> -> vector<8x8xf32>
    %100 = vector.extract_strided_slice %91 {offsets = [1, 0, 0], sizes = [1, 8, 8], strides = [1, 1, 1]} : vector<2x8x8xf32> to vector<1x8x8xf32>
    %101 = vector.shape_cast %100 : vector<1x8x8xf32> to vector<8x8xf32>
    %102 = tpu.transpose %101, [1, 0] : vector<8x8xf32> -> vector<8x8xf32>
    %103 = tpu.concatenate %99, %102 in 0 : vector<8x8xf32>, vector<8x8xf32> -> vector<16x8xf32>
    %cst_49 = arith.constant dense<0.000000e+00> : vector<16x16xf32>
    %104 = tpu.matmul %96, %1, %cst_49 {dimension_numbers = #tpu.dot_dimension_numbers<[1], [0], [0], [1], [0, 0, 1, 1], [], []>} : vector<16x8xf32>, vector<8x16xf32>, vector<16x16xf32> -> vector<16x16xf32>
    %cst_50 = arith.constant dense<0.000000e+00> : vector<16x16xf32>
    %105 = tpu.matmul %103, %1, %cst_50 {dimension_numbers = #tpu.dot_dimension_numbers<[1], [0], [0], [1], [0, 0, 1, 1], [], []>} : vector<16x8xf32>, vector<8x16xf32>, vector<16x16xf32> -> vector<16x16xf32>
    %106 = tpu.concatenate %104, %105 in 1 : vector<16x16xf32>, vector<16x16xf32> -> vector<16x32xf32>
    %cst_51 = arith.constant dense<0.000000e+00> : vector<16x32xf32>
    %107 = tpu.matmul %106, %4, %cst_51 {dimension_numbers = #tpu.dot_dimension_numbers<[1], [0], [0], [1], [0, 0, 1, 1], [], []>} : vector<16x32xf32>, vector<32x32xf32>, vector<16x32xf32> -> vector<16x32xf32>
    %108 = vector.broadcast %5 : vector<1x32xf32> to vector<16x32xf32>
    %109 = arith.addf %107, %108 : vector<16x32xf32>
    %110 = math.tanh %109 : vector<16x32xf32>
    %111 = tpu.concatenate %90, %110 in 1 : vector<16x32xf32>, vector<16x32xf32> -> vector<16x64xf32>
    %cst_52 = arith.constant dense<0.000000e+00> : vector<16x16xf32>
    %112 = tpu.matmul %111, %8, %cst_52 {dimension_numbers = #tpu.dot_dimension_numbers<[1], [0], [0], [1], [0, 0, 1, 1], [], []>} : vector<16x64xf32>, vector<64x16xf32>, vector<16x16xf32> -> vector<16x16xf32>
    %113 = vector.broadcast %9 : vector<1x16xf32> to vector<16x16xf32>
    %114 = arith.addf %112, %113 : vector<16x16xf32>
    %115 = vector.extract_strided_slice %114 {offsets = [0, 0], sizes = [16, 8], strides = [1, 1]} : vector<16x16xf32> to vector<16x8xf32>
    %116 = vector.extract_strided_slice %10 {offsets = [0, 0], sizes = [1, 8], strides = [1, 1]} : vector<1x16xf32> to vector<1x8xf32>
    %117 = vector.extract_strided_slice %11 {offsets = [0, 0], sizes = [1, 8], strides = [1, 1]} : vector<1x16xf32> to vector<1x8xf32>
    %cst_53 = arith.constant dense<0.000000e+00> : vector<16xf32>
    %118 = vector.multi_reduction <add>, %115, %cst_53 [1] : vector<16x8xf32> to vector<16xf32>
    %119 = vector.shape_cast %118 : vector<16xf32> to vector<16x1xf32>
    %cst_54 = arith.constant 8.000000e+00 : f32
    %120 = vector.broadcast %cst_54 : f32 to vector<16x1xf32>
    %121 = arith.divf %119, %120 : vector<16x1xf32>
    %122 = vector.broadcast %121 : vector<16x1xf32> to vector<16x8xf32>
    %123 = arith.subf %115, %122 : vector<16x8xf32>
    %124 = arith.mulf %123, %123 : vector<16x8xf32>
    %cst_55 = arith.constant dense<0.000000e+00> : vector<16xf32>
    %125 = vector.multi_reduction <add>, %124, %cst_55 [1] : vector<16x8xf32> to vector<16xf32>
    %126 = vector.shape_cast %125 : vector<16xf32> to vector<16x1xf32>
    %cst_56 = arith.constant 8.000000e+00 : f32
    %127 = vector.broadcast %cst_56 : f32 to vector<16x1xf32>
    %128 = arith.divf %126, %127 : vector<16x1xf32>
    %cst_57 = arith.constant 9.99999974E-6 : f32
    %129 = vector.broadcast %cst_57 : f32 to vector<16x1xf32>
    %130 = arith.addf %128, %129 : vector<16x1xf32>
    %131 = math.rsqrt %130 : vector<16x1xf32>
    %132 = vector.broadcast %131 : vector<16x1xf32> to vector<16x8xf32>
    %133 = arith.mulf %123, %132 : vector<16x8xf32>
    %134 = vector.broadcast %116 : vector<1x8xf32> to vector<16x8xf32>
    %135 = arith.mulf %133, %134 : vector<16x8xf32>
    %136 = vector.broadcast %117 : vector<1x8xf32> to vector<16x8xf32>
    %137 = arith.addf %135, %136 : vector<16x8xf32>
    %138 = vector.extract_strided_slice %114 {offsets = [0, 8], sizes = [16, 8], strides = [1, 1]} : vector<16x16xf32> to vector<16x8xf32>
    %139 = vector.extract_strided_slice %10 {offsets = [0, 8], sizes = [1, 8], strides = [1, 1]} : vector<1x16xf32> to vector<1x8xf32>
    %140 = vector.extract_strided_slice %11 {offsets = [0, 8], sizes = [1, 8], strides = [1, 1]} : vector<1x16xf32> to vector<1x8xf32>
    %cst_58 = arith.constant dense<0.000000e+00> : vector<16xf32>
    %141 = vector.multi_reduction <add>, %138, %cst_58 [1] : vector<16x8xf32> to vector<16xf32>
    %142 = vector.shape_cast %141 : vector<16xf32> to vector<16x1xf32>
    %cst_59 = arith.constant 8.000000e+00 : f32
    %143 = vector.broadcast %cst_59 : f32 to vector<16x1xf32>
    %144 = arith.divf %142, %143 : vector<16x1xf32>
    %145 = vector.broadcast %144 : vector<16x1xf32> to vector<16x8xf32>
    %146 = arith.subf %138, %145 : vector<16x8xf32>
    %147 = arith.mulf %146, %146 : vector<16x8xf32>
    %cst_60 = arith.constant dense<0.000000e+00> : vector<16xf32>
    %148 = vector.multi_reduction <add>, %147, %cst_60 [1] : vector<16x8xf32> to vector<16xf32>
    %149 = vector.shape_cast %148 : vector<16xf32> to vector<16x1xf32>
    %cst_61 = arith.constant 8.000000e+00 : f32
    %150 = vector.broadcast %cst_61 : f32 to vector<16x1xf32>
    %151 = arith.divf %149, %150 : vector<16x1xf32>
    %cst_62 = arith.constant 9.99999974E-6 : f32
    %152 = vector.broadcast %cst_62 : f32 to vector<16x1xf32>
    %153 = arith.addf %151, %152 : vector<16x1xf32>
    %154 = math.rsqrt %153 : vector<16x1xf32>
    %155 = vector.broadcast %154 : vector<16x1xf32> to vector<16x8xf32>
    %156 = arith.mulf %146, %155 : vector<16x8xf32>
    %157 = vector.broadcast %139 : vector<1x8xf32> to vector<16x8xf32>
    %158 = arith.mulf %156, %157 : vector<16x8xf32>
    %159 = vector.broadcast %140 : vector<1x8xf32> to vector<16x8xf32>
    %160 = arith.addf %158, %159 : vector<16x8xf32>
    %161 = vector.extract_strided_slice %137 {offsets = [0, 0], sizes = [8, 8], strides = [1, 1]} : vector<16x8xf32> to vector<8x8xf32>
    %162 = vector.extract_strided_slice %160 {offsets = [0, 0], sizes = [8, 8], strides = [1, 1]} : vector<16x8xf32> to vector<8x8xf32>
    %163 = tpu.transpose %162, [1, 0] : vector<8x8xf32> -> vector<8x8xf32>
    %cst_63 = arith.constant dense<0.000000e+00> : vector<8x8xf32>
    %164 = tpu.matmul %161, %163, %cst_63 {dimension_numbers = #tpu.dot_dimension_numbers<[1], [0], [0], [1], [0, 0, 1, 1], [], []>} : vector<8x8xf32>, vector<8x8xf32>, vector<8x8xf32> -> vector<8x8xf32>
    %165 = arith.negf %164 : vector<8x8xf32>
    %166 = math.exp %165 : vector<8x8xf32>
    %cst_64 = arith.constant 1.000000e+00 : f32
    %167 = vector.broadcast %cst_64 : f32 to vector<8x8xf32>
    %168 = arith.addf %167, %166 : vector<8x8xf32>
    %169 = arith.divf %167, %168 : vector<8x8xf32>
    %c0_65 = arith.constant 0 : index
    %c0_66 = arith.constant 0 : index
    %c0_67 = arith.constant 0 : index
    %170 = vector.load %arg15[%c0_65, %c0_66, %c0_67] : memref<2x8x8xf32, #tpu.memory_space<vmem>>, vector<1x8x8xf32>
    %171 = vector.shape_cast %170 : vector<1x8x8xf32> to vector<8x8xf32>
    %172 = vector.shape_cast %169 : vector<8x8xf32> to vector<1x8x8xf32>
    tpu.vector_store %arg15[%c0_65, %c0_66, %c0_67], %172 {strides = array<i32>} : memref<2x8x8xf32, #tpu.memory_space<vmem>>, vector<1x8x8xf32>,
    %173 = vector.extract_strided_slice %137 {offsets = [8, 0], sizes = [8, 8], strides = [1, 1]} : vector<16x8xf32> to vector<8x8xf32>
    %174 = vector.extract_strided_slice %160 {offsets = [8, 0], sizes = [8, 8], strides = [1, 1]} : vector<16x8xf32> to vector<8x8xf32>
    %175 = tpu.transpose %174, [1, 0] : vector<8x8xf32> -> vector<8x8xf32>
    %cst_68 = arith.constant dense<0.000000e+00> : vector<8x8xf32>
    %176 = tpu.matmul %173, %175, %cst_68 {dimension_numbers = #tpu.dot_dimension_numbers<[1], [0], [0], [1], [0, 0, 1, 1], [], []>} : vector<8x8xf32>, vector<8x8xf32>, vector<8x8xf32> -> vector<8x8xf32>
    %177 = arith.negf %176 : vector<8x8xf32>
    %178 = math.exp %177 : vector<8x8xf32>
    %cst_69 = arith.constant 1.000000e+00 : f32
    %179 = vector.broadcast %cst_69 : f32 to vector<8x8xf32>
    %180 = arith.addf %179, %178 : vector<8x8xf32>
    %181 = arith.divf %179, %180 : vector<8x8xf32>
    %c1_70 = arith.constant 1 : index
    %c0_71 = arith.constant 0 : index
    %c0_72 = arith.constant 0 : index
    %182 = vector.load %arg15[%c1_70, %c0_71, %c0_72] : memref<2x8x8xf32, #tpu.memory_space<vmem>>, vector<1x8x8xf32>
    %183 = vector.shape_cast %182 : vector<1x8x8xf32> to vector<8x8xf32>
    %184 = vector.shape_cast %181 : vector<8x8xf32> to vector<1x8x8xf32>
    tpu.vector_store %arg15[%c1_70, %c0_71, %c0_72], %184 {strides = array<i32>} : memref<2x8x8xf32, #tpu.memory_space<vmem>>, vector<1x8x8xf32>,
    return
  }
}

</mosaic_0001>

<llo_original>
// kernel: resnmmf_forward.1
$region0: #{resnmmf_forward.1}
  #allocation0 [shape = 'u32[]', space=smem, size = 0x4, offset = 0x4, fixed_abs, tag = 'smem constant byte address 0x4 - core index']
  #allocation1 [shape = 'u32[144,128]{1,0:T(1,128)}', space=vmem, size = 0x12000, scoped, tag = 'internal scratch']
  %s0 = inlined_call_operand.vmem [shape: f32[3,2,8,8], index: 0, kind: input, shape index: {}]
  %s1 = inlined_call_operand.vmem [shape: f32[2,8,8], index: 1, kind: input, shape index: {}]
  %s2 = inlined_call_operand.vmem [shape: f32[8,16], index: 2, kind: input, shape index: {}]
  %s3 = inlined_call_operand.vmem [shape: f32[8,16], index: 3, kind: input, shape index: {}]
  %s4 = inlined_call_operand.vmem [shape: f32[32,32], index: 4, kind: input, shape index: {}]
  %s5 = inlined_call_operand.vmem [shape: f32[1,32], index: 5, kind: input, shape index: {}]
  %s6 = inlined_call_operand.vmem [shape: f32[32,32], index: 6, kind: input, shape index: {}]
  %s7 = inlined_call_operand.vmem [shape: f32[1,32], index: 7, kind: input, shape index: {}]
  %s8 = inlined_call_operand.vmem [shape: f32[64,32], index: 8, kind: input, shape index: {}]
  %s9 = inlined_call_operand.vmem [shape: f32[1,32], index: 9, kind: input, shape index: {}]
  %s10 = inlined_call_operand.vmem [shape: f32[16,32], index: 10, kind: input, shape index: {}]
  %s11 = inlined_call_operand.vmem [shape: f32[64,16], index: 11, kind: input, shape index: {}]
  %s12 = inlined_call_operand.vmem [shape: f32[1,16], index: 12, kind: input, shape index: {}]
  %s13 = inlined_call_operand.vmem [shape: f32[1,16], index: 13, kind: input, shape index: {}]
  %s14 = inlined_call_operand.vmem [shape: f32[1,16], index: 14, kind: input, shape index: {}]
  %s15 = inlined_call_operand.hbm [shape: f32[2,8,8], index: 15, kind: output, shape index: {}]
  %s16 = sld [smem:[#allocation0]]
  $region70: #{resnmmf_forward.1} parent=0
    _
  %s18 = ssub.s32 1, %s16
  %s19 = scalar_select 0, %s18, %s16
  $region1: #{resnmmf_forward.1} parent=0
    #allocation2 [shape = 'u8[8192]{0}', space=vmem, size = 0x2000, scoped, tag = 'output window, operand 0, single buffered']
    #allocation3 [shape = 's32[1]{0}', space=sflag, size = 0x4, scoped, tag = 'scoped memory for resnmmf_forward.1']
    %20 = vsyncpa [#allocation3], 0
    // Predicated region
    $region2: #{resnmmf_forward.1} parent=1 // pred_check
      _
    $region3: #{resnmmf_forward.1} parent=1 // pred_check_branch
      %22 = sbr.rel (0) target = $region5
    $region4: #{resnmmf_forward.1} parent=1 // pred_region
      _
    $region5: #{resnmmf_forward.1} parent=1 // pred_fallthru
      _
    // Predicated region
    $region6: #{resnmmf_forward.1} parent=1 // pred_check
      _
    $region7: #{resnmmf_forward.1} parent=1 // pred_check_branch
      %24 = sbr.rel (0) target = $region9
    $region8: #{resnmmf_forward.1} parent=1 // pred_region
      _
    $region9: #{resnmmf_forward.1} parent=1 // pred_fallthru
      _
    // Predicated region
    $region10: #{resnmmf_forward.1} parent=1 // pred_check
      _
    $region11: #{resnmmf_forward.1} parent=1 // pred_check_branch
      %26 = sbr.rel (0) target = $region13
    $region12: #{resnmmf_forward.1} parent=1 // pred_region
      _
    $region13: #{resnmmf_forward.1} parent=1 // pred_fallthru
      _
    // Predicated region
    $region14: #{resnmmf_forward.1} parent=1 // pred_check
      _
    $region15: #{resnmmf_forward.1} parent=1 // pred_check_branch
      %28 = sbr.rel (0) target = $region17
    $region16: #{resnmmf_forward.1} parent=1 // pred_region
      _
    $region17: #{resnmmf_forward.1} parent=1 // pred_fallthru
      _
    // Predicated region
    $region18: #{resnmmf_forward.1} parent=1 // pred_check
      _
    $region19: #{resnmmf_forward.1} parent=1 // pred_check_branch
      %30 = sbr.rel (0) target = $region21
    $region20: #{resnmmf_forward.1} parent=1 // pred_region
      _
    $region21: #{resnmmf_forward.1} parent=1 // pred_fallthru
      _
    // Predicated region
    $region22: #{resnmmf_forward.1} parent=1 // pred_check
      _
    $region23: #{resnmmf_forward.1} parent=1 // pred_check_branch
      %32 = sbr.rel (0) target = $region25
    $region24: #{resnmmf_forward.1} parent=1 // pred_region
      _
    $region25: #{resnmmf_forward.1} parent=1 // pred_fallthru
      _
    // Predicated region
    $region26: #{resnmmf_forward.1} parent=1 // pred_check
      _
    $region27: #{resnmmf_forward.1} parent=1 // pred_check_branch
      %34 = sbr.rel (0) target = $region29
    $region28: #{resnmmf_forward.1} parent=1 // pred_region
      _
    $region29: #{resnmmf_forward.1} parent=1 // pred_fallthru
      _
    // Predicated region
    $region30: #{resnmmf_forward.1} parent=1 // pred_check
      _
    $region31: #{resnmmf_forward.1} parent=1 // pred_check_branch
      %36 = sbr.rel (0) target = $region33
    $region32: #{resnmmf_forward.1} parent=1 // pred_region
      _
    $region33: #{resnmmf_forward.1} parent=1 // pred_fallthru
      _
    // Predicated region
    $region34: #{resnmmf_forward.1} parent=1 // pred_check
      _
    $region35: #{resnmmf_forward.1} parent=1 // pred_check_branch
      %38 = sbr.rel (0) target = $region37
    $region36: #{resnmmf_forward.1} parent=1 // pred_region
      _
    $region37: #{resnmmf_forward.1} parent=1 // pred_fallthru
      _
    // Predicated region
    $region38: #{resnmmf_forward.1} parent=1 // pred_check
      _
    $region39: #{resnmmf_forward.1} parent=1 // pred_check_branch
      %40 = sbr.rel (0) target = $region41
    $region40: #{resnmmf_forward.1} parent=1 // pred_region
      _
    $region41: #{resnmmf_forward.1} parent=1 // pred_fallthru
      _
    // Predicated region
    $region42: #{resnmmf_forward.1} parent=1 // pred_check
      _
    $region43: #{resnmmf_forward.1} parent=1 // pred_check_branch
      %42 = sbr.rel (0) target = $region45
    $region44: #{resnmmf_forward.1} parent=1 // pred_region
      _
    $region45: #{resnmmf_forward.1} parent=1 // pred_fallthru
      _
    // Predicated region
    $region46: #{resnmmf_forward.1} parent=1 // pred_check
      _
    $region47: #{resnmmf_forward.1} parent=1 // pred_check_branch
      %44 = sbr.rel (0) target = $region49
    $region48: #{resnmmf_forward.1} parent=1 // pred_region
      _
    $region49: #{resnmmf_forward.1} parent=1 // pred_fallthru
      _
    // Predicated region
    $region50: #{resnmmf_forward.1} parent=1 // pred_check
      _
    $region51: #{resnmmf_forward.1} parent=1 // pred_check_branch
      %46 = sbr.rel (0) target = $region53
    $region52: #{resnmmf_forward.1} parent=1 // pred_region
      _
    $region53: #{resnmmf_forward.1} parent=1 // pred_fallthru
      _
    // Predicated region
    $region54: #{resnmmf_forward.1} parent=1 // pred_check
      _
    $region55: #{resnmmf_forward.1} parent=1 // pred_check_branch
      %48 = sbr.rel (0) target = $region57
    $region56: #{resnmmf_forward.1} parent=1 // pred_region
      _
    $region57: #{resnmmf_forward.1} parent=1 // pred_fallthru
      _
    // Predicated region
    $region58: #{resnmmf_forward.1} parent=1 // pred_check
      _
    $region59: #{resnmmf_forward.1} parent=1 // pred_check_branch
      %50 = sbr.rel (0) target = $region61
    $region60: #{resnmmf_forward.1} parent=1 // pred_region
      _
    $region61: #{resnmmf_forward.1} parent=1 // pred_fallthru
      _
    %v51 = vld [vmem:[%s2] sm:$0xff]
    %v52 = vld [vmem:[%s3] sm:$0xff]
    %v53 = vld [vmem:[%s4] sm:$0xff]
    %v54 = vld [vmem:[%s4 + $0x8] sm:$0xff]
    %v55 = vld [vmem:[%s4 + $0x10] sm:$0xff]
    %v56 = vld [vmem:[%s4 + $0x18] sm:$0xff]
    %v57 = vld [vmem:[%s5] sm:$0x1]
    %v58 = vld [vmem:[%s6] sm:$0xff]
    %v59 = vld [vmem:[%s6 + $0x8] sm:$0xff]
    %v60 = vld [vmem:[%s6 + $0x10] sm:$0xff]
    %v61 = vld [vmem:[%s6 + $0x18] sm:$0xff]
    %v62 = vld [vmem:[%s7] sm:$0x1]
    %v63 = vld [vmem:[%s8] sm:$0xff]
    %v64 = vld [vmem:[%s8 + $0x8] sm:$0xff]
    %v65 = vld [vmem:[%s8 + $0x10] sm:$0xff]
    %v66 = vld [vmem:[%s8 + $0x18] sm:$0xff]
    %v67 = vld [vmem:[%s8 + $0x20] sm:$0xff]
    %v68 = vld [vmem:[%s8 + $0x28] sm:$0xff]
    %v69 = vld [vmem:[%s8 + $0x30] sm:$0xff]
    %v70 = vld [vmem:[%s8 + $0x38] sm:$0xff]
    %v71 = vld [vmem:[%s9] sm:$0x1]
    %v72 = vld [vmem:[%s11] sm:$0xff]
    %v73 = vld [vmem:[%s11 + $0x8] sm:$0xff]
    %v74 = vld [vmem:[%s11 + $0x10] sm:$0xff]
    %v75 = vld [vmem:[%s11 + $0x18] sm:$0xff]
    %v76 = vld [vmem:[%s11 + $0x20] sm:$0xff]
    %v77 = vld [vmem:[%s11 + $0x28] sm:$0xff]
    %v78 = vld [vmem:[%s11 + $0x30] sm:$0xff]
    %v79 = vld [vmem:[%s11 + $0x38] sm:$0xff]
    %v80 = vld [vmem:[%s12] sm:$0x1]
    %v81 = vld [vmem:[%s13] sm:$0x1]
    %v82 = vld [vmem:[%s14] sm:$0x1]
    %v83 = vld [vmem:[%s10] sm:$0xff]
    %v84 = vld [vmem:[%s10 + $0x8] sm:$0xff]
    %v85 = vld [vmem:[%s0] sm:$0xff]
    %v86 = vld [vmem:[%s0 + $0x8] sm:$0xff]
    %87 = vxpose.xlu0.b32.start [1/16] %v85, 128
    %88 = vxpose.xlu0.b32.cont [2/16] 0.0, 128
    %89 = vxpose.xlu0.b32.cont [3/16] 0.0, 128
    %90 = vxpose.xlu0.b32.cont [4/16] 0.0, 128
    %91 = vxpose.xlu0.b32.cont [5/16] 0.0, 128
    %92 = vxpose.xlu0.b32.cont [6/16] 0.0, 128
    %93 = vxpose.xlu0.b32.cont [7/16] 0.0, 128
    %94 = vxpose.xlu0.b32.cont [8/16] 0.0, 128
    %95 = vxpose.xlu0.b32.cont [9/16] 0.0, 128
    %96 = vxpose.xlu0.b32.cont [10/16] 0.0, 128
    %97 = vxpose.xlu0.b32.cont [11/16] 0.0, 128
    %98 = vxpose.xlu0.b32.cont [12/16] 0.0, 128
    %99 = vxpose.xlu0.b32.cont [13/16] 0.0, 128
    %100 = vxpose.xlu0.b32.cont [14/16] 0.0, 128
    %101 = vxpose.xlu0.b32.cont [15/16] 0.0, 128
    %102 = vxpose.xlu0.b32.end [16/16] 0.0, 128
    %v103 = vpop.trf.xlu0
    %v104 = vpop.trf.xlu0
    %v105 = vpop.trf.xlu0
    %v106 = vpop.trf.xlu0
    %v107 = vpop.trf.xlu0
    %v108 = vpop.trf.xlu0
    %v109 = vpop.trf.xlu0
    %v110 = vpop.trf.xlu0
    %v111 = vpop.trf.xlu0
    %v112 = vpop.trf.xlu0
    %v113 = vpop.trf.xlu0
    %v114 = vpop.trf.xlu0
    %v115 = vpop.trf.xlu0
    %v116 = vpop.trf.xlu0
    %v117 = vpop.trf.xlu0
    %v118 = vpop.trf.xlu0
    %119 = vxpose.xlu0.b32.start [1/16] %v86, 128
    %120 = vxpose.xlu0.b32.cont [2/16] 0.0, 128
    %121 = vxpose.xlu0.b32.cont [3/16] 0.0, 128
    %122 = vxpose.xlu0.b32.cont [4/16] 0.0, 128
    %123 = vxpose.xlu0.b32.cont [5/16] 0.0, 128
    %124 = vxpose.xlu0.b32.cont [6/16] 0.0, 128
    %125 = vxpose.xlu0.b32.cont [7/16] 0.0, 128
    %126 = vxpose.xlu0.b32.cont [8/16] 0.0, 128
    %127 = vxpose.xlu0.b32.cont [9/16] 0.0, 128
    %128 = vxpose.xlu0.b32.cont [10/16] 0.0, 128
    %129 = vxpose.xlu0.b32.cont [11/16] 0.0, 128
    %130 = vxpose.xlu0.b32.cont [12/16] 0.0, 128
    %131 = vxpose.xlu0.b32.cont [13/16] 0.0, 128
    %132 = vxpose.xlu0.b32.cont [14/16] 0.0, 128
    %133 = vxpose.xlu0.b32.cont [15/16] 0.0, 128
    %134 = vxpose.xlu0.b32.end [16/16] 0.0, 128
    %v135 = vpop.trf.xlu0
    %v136 = vpop.trf.xlu0
    %v137 = vpop.trf.xlu0
    %v138 = vpop.trf.xlu0
    %v139 = vpop.trf.xlu0
    %v140 = vpop.trf.xlu0
    %v141 = vpop.trf.xlu0
    %v142 = vpop.trf.xlu0
    %v143 = vpop.trf.xlu0
    %v144 = vpop.trf.xlu0
    %v145 = vpop.trf.xlu0
    %v146 = vpop.trf.xlu0
    %v147 = vpop.trf.xlu0
    %v148 = vpop.trf.xlu0
    %v149 = vpop.trf.xlu0
    %v150 = vpop.trf.xlu0
    %vm151 = vcmask 64512
    %v153 = vsel %vm151, %v85, 0
    %v156 = vsel %vm151, %v86, 0
    %158 = vmatprep.subr.mxu0 0.0
    %159 = vmatpush1.msra.mxu0 %v51
    %160 = vmatprep.subr.mxu0 0.0
    %161 = vmatpush1.msra.mxu0 0.0
    %162 = vmatprep.subr.mxu0 0.0
    %163 = vmatpush1.msra.mxu0 0.0
    %164 = vmatprep.subr.mxu0 0.0
    %165 = vmatpush1.msra.mxu0 0.0
    %166 = vmatprep.subr.mxu0 0.0
    %167 = vmatpush1.msra.mxu0 0.0
    %168 = vmatprep.subr.mxu0 0.0
    %169 = vmatpush1.msra.mxu0 0.0
    %170 = vmatprep.subr.mxu0 0.0
    %171 = vmatpush1.msra.mxu0 0.0
    %172 = vmatprep.subr.mxu0 0.0
    %173 = vmatpush1.msra.mxu0 0.0
    %174 = vmatprep.subr.mxu0 0.0
    %175 = vmatpush1.msra.mxu0 0.0
    %176 = vmatprep.subr.mxu0 0.0
    %177 = vmatpush1.msra.mxu0 0.0
    %178 = vmatprep.subr.mxu0 0.0
    %179 = vmatpush1.msra.mxu0 0.0
    %180 = vmatprep.subr.mxu0 0.0
    %181 = vmatpush1.msra.mxu0 0.0
    %182 = vmatprep.subr.mxu0 0.0
    %183 = vmatpush1.msra.mxu0 0.0
    %184 = vmatprep.subr.mxu0 0.0
    %185 = vmatpush1.msra.mxu0 0.0
    %186 = vmatprep.subr.mxu0 0.0
    %187 = vmatpush1.msra.mxu0 0.0
    %188 = vmatprep.subr.mxu0 0.0
    %189 = vmatpush1.msra.mxu0 0.0
    %190 = vmatprep.subr.mxu0 0.0
    %191 = vmatpush1.msra.mxu0 0.0
    %192 = vmatprep.subr.mxu0 0.0
    %193 = vmatpush1.msra.mxu0 0.0
    %194 = vmatprep.subr.mxu0 0.0
    %195 = vmatpush1.msra.mxu0 0.0
    %196 = vmatprep.subr.mxu0 0.0
    %197 = vmatpush1.msra.mxu0 0.0
    %198 = vmatprep.subr.mxu0 0.0
    %199 = vmatpush1.msra.mxu0 0.0
    %200 = vmatprep.subr.mxu0 0.0
    %201 = vmatpush1.msra.mxu0 0.0
    %202 = vmatprep.subr.mxu0 0.0
    %203 = vmatpush1.msra.mxu0 0.0
    %204 = vmatprep.subr.mxu0 0.0
    %205 = vmatpush1.msra.mxu0 0.0
    %206 = vmatprep.subr.mxu0 0.0
    %207 = vmatpush1.msra.mxu0 0.0
    %208 = vmatprep.subr.mxu0 0.0
    %209 = vmatpush1.msra.mxu0 0.0
    %210 = vmatprep.subr.mxu0 0.0
    %211 = vmatpush1.msra.mxu0 0.0
    %212 = vmatprep.subr.mxu0 0.0
    %213 = vmatpush1.msra.mxu0 0.0
    %214 = vmatprep.subr.mxu0 0.0
    %215 = vmatpush1.msra.mxu0 0.0
    %216 = vmatprep.subr.mxu0 0.0
    %217 = vmatpush1.msra.mxu0 0.0
    %218 = vmatprep.subr.mxu0 0.0
    %219 = vmatpush1.msra.mxu0 0.0
    %220 = vmatprep.subr.mxu0 0.0
    %221 = vmatpush1.msra.mxu0 0.0
    %222 = vmatprep.mubr.f32.mxu0 0.0
    %223 = vmatmul.mubr.f32.gmra.mrb[0].mxu0 %v153
    %v224 = vpop.f32.mrb[0].mxu0
    %v225 = vadd.f32 0.0, %v224
    %v226 = vpop.f32.mrb[0].mxu0
    %227 = vmatprep.mubr.f32.mxu0 0.0
    %228 = vmatmul.mubr.f32.gmra.mrb[0].mxu0 %v156
    %v229 = vpop.f32.mrb[0].mxu0
    %v230 = vadd.f32 0.0, %v229
    %v231 = vpop.f32.mrb[0].mxu0
    %232 = vdwg.mxu0
    %v234 = vsel %vm151, %v103, 0
    %v237 = vsel %vm151, %v135, 0
    %239 = vmatprep.subr.mxu0 0.0
    %240 = vmatpush1.msra.mxu0 %v51
    %241 = vmatprep.subr.mxu0 0.0
    %242 = vmatpush1.msra.mxu0 0.0
    %243 = vmatprep.subr.mxu0 0.0
    %244 = vmatpush1.msra.mxu0 0.0
    %245 = vmatprep.subr.mxu0 0.0
    %246 = vmatpush1.msra.mxu0 0.0
    %247 = vmatprep.subr.mxu0 0.0
    %248 = vmatpush1.msra.mxu0 0.0
    %249 = vmatprep.subr.mxu0 0.0
    %250 = vmatpush1.msra.mxu0 0.0
    %251 = vmatprep.subr.mxu0 0.0
    %252 = vmatpush1.msra.mxu0 0.0
    %253 = vmatprep.subr.mxu0 0.0
    %254 = vmatpush1.msra.mxu0 0.0
    %255 = vmatprep.subr.mxu0 0.0
    %256 = vmatpush1.msra.mxu0 0.0
    %257 = vmatprep.subr.mxu0 0.0
    %258 = vmatpush1.msra.mxu0 0.0
    %259 = vmatprep.subr.mxu0 0.0
    %260 = vmatpush1.msra.mxu0 0.0
    %261 = vmatprep.subr.mxu0 0.0
    %262 = vmatpush1.msra.mxu0 0.0
    %263 = vmatprep.subr.mxu0 0.0
    %264 = vmatpush1.msra.mxu0 0.0
    %265 = vmatprep.subr.mxu0 0.0
    %266 = vmatpush1.msra.mxu0 0.0
    %267 = vmatprep.subr.mxu0 0.0
    %268 = vmatpush1.msra.mxu0 0.0
    %269 = vmatprep.subr.mxu0 0.0
    %270 = vmatpush1.msra.mxu0 0.0
    %271 = vmatprep.subr.mxu0 0.0
    %272 = vmatpush1.msra.mxu0 0.0
    %273 = vmatprep.subr.mxu0 0.0
    %274 = vmatpush1.msra.mxu0 0.0
    %275 = vmatprep.subr.mxu0 0.0
    %276 = vmatpush1.msra.mxu0 0.0
    %277 = vmatprep.subr.mxu0 0.0
    %278 = vmatpush1.msra.mxu0 0.0
    %279 = vmatprep.subr.mxu0 0.0
    %280 = vmatpush1.msra.mxu0 0.0
    %281 = vmatprep.subr.mxu0 0.0
    %282 = vmatpush1.msra.mxu0 0.0
    %283 = vmatprep.subr.mxu0 0.0
    %284 = vmatpush1.msra.mxu0 0.0
    %285 = vmatprep.subr.mxu0 0.0
    %286 = vmatpush1.msra.mxu0 0.0
    %287 = vmatprep.subr.mxu0 0.0
    %288 = vmatpush1.msra.mxu0 0.0
    %289 = vmatprep.subr.mxu0 0.0
    %290 = vmatpush1.msra.mxu0 0.0
    %291 = vmatprep.subr.mxu0 0.0
    %292 = vmatpush1.msra.mxu0 0.0
    %293 = vmatprep.subr.mxu0 0.0
    %294 = vmatpush1.msra.mxu0 0.0
    %295 = vmatprep.subr.mxu0 0.0
    %296 = vmatpush1.msra.mxu0 0.0
    %297 = vmatprep.subr.mxu0 0.0
    %298 = vmatpush1.msra.mxu0 0.0
    %299 = vmatprep.subr.mxu0 0.0
    %300 = vmatpush1.msra.mxu0 0.0
    %301 = vmatprep.subr.mxu0 0.0
    %302 = vmatpush1.msra.mxu0 0.0
    %303 = vmatprep.mubr.f32.mxu0 0.0
    %304 = vmatmul.mubr.f32.gmra.mrb[0].mxu0 %v234
    %v305 = vpop.f32.mrb[0].mxu0
    %v306 = vadd.f32 0.0, %v305
    %v307 = vpop.f32.mrb[0].mxu0
    %308 = vmatprep.mubr.f32.mxu0 0.0
    %309 = vmatmul.mubr.f32.gmra.mrb[0].mxu0 %v237
    %v310 = vpop.f32.mrb[0].mxu0
    %v311 = vadd.f32 0.0, %v310
    %v312 = vpop.f32.mrb[0].mxu0
    %313 = vdwg.mxu0
    %316 = vrot.lane.b32.xlu0 %v306, 16
    %v317 = vpop.permute.xlu0 %316
    %318 = vrot.lane.b32.xlu0 %v311, 16
    %v319 = vpop.permute.xlu0 %318
    %vm322 = vcmask 130048
    %v323 = vsel %vm322, %v225, %v317
    %v324 = vsel %vm322, %v230, %v319
    %v326 = vlaneseq
    %v327 = vshrl.u32 %v326, 7
    %v328 = vsub.s32 0, %v327
    %v329 = vrot.slane %v57, %v328
    %vm331 = vcmask 261120
    %v333 = vsel %vm331, %v323, 0
    %v336 = vsel %vm331, %v324, 0
    %338 = vmatprep.subr.mxu0 0.0
    %339 = vmatpush1.msra.mxu0 %v53
    %340 = vmatprep.subr.mxu0 0.0
    %341 = vmatpush1.msra.mxu0 %v54
    %342 = vmatprep.subr.mxu0 0.0
    %343 = vmatpush1.msra.mxu0 %v55
    %344 = vmatprep.subr.mxu0 0.0
    %345 = vmatpush1.msra.mxu0 %v56
    %346 = vmatprep.subr.mxu0 0.0
    %347 = vmatpush1.msra.mxu0 0.0
    %348 = vmatprep.subr.mxu0 0.0
    %349 = vmatpush1.msra.mxu0 0.0
    %350 = vmatprep.subr.mxu0 0.0
    %351 = vmatpush1.msra.mxu0 0.0
    %352 = vmatprep.subr.mxu0 0.0
    %353 = vmatpush1.msra.mxu0 0.0
    %354 = vmatprep.subr.mxu0 0.0
    %355 = vmatpush1.msra.mxu0 0.0
    %356 = vmatprep.subr.mxu0 0.0
    %357 = vmatpush1.msra.mxu0 0.0
    %358 = vmatprep.subr.mxu0 0.0
    %359 = vmatpush1.msra.mxu0 0.0
    %360 = vmatprep.subr.mxu0 0.0
    %361 = vmatpush1.msra.mxu0 0.0
    %362 = vmatprep.subr.mxu0 0.0
    %363 = vmatpush1.msra.mxu0 0.0
    %364 = vmatprep.subr.mxu0 0.0
    %365 = vmatpush1.msra.mxu0 0.0
    %366 = vmatprep.subr.mxu0 0.0
    %367 = vmatpush1.msra.mxu0 0.0
    %368 = vmatprep.subr.mxu0 0.0
    %369 = vmatpush1.msra.mxu0 0.0
    %370 = vmatprep.subr.mxu0 0.0
    %371 = vmatpush1.msra.mxu0 0.0
    %372 = vmatprep.subr.mxu0 0.0
    %373 = vmatpush1.msra.mxu0 0.0
    %374 = vmatprep.subr.mxu0 0.0
    %375 = vmatpush1.msra.mxu0 0.0
    %376 = vmatprep.subr.mxu0 0.0
    %377 = vmatpush1.msra.mxu0 0.0
    %378 = vmatprep.subr.mxu0 0.0
    %379 = vmatpush1.msra.mxu0 0.0
    %380 = vmatprep.subr.mxu0 0.0
    %381 = vmatpush1.msra.mxu0 0.0
    %382 = vmatprep.subr.mxu0 0.0
    %383 = vmatpush1.msra.mxu0 0.0
    %384 = vmatprep.subr.mxu0 0.0
    %385 = vmatpush1.msra.mxu0 0.0
    %386 = vmatprep.subr.mxu0 0.0
    %387 = vmatpush1.msra.mxu0 0.0
    %388 = vmatprep.subr.mxu0 0.0
    %389 = vmatpush1.msra.mxu0 0.0
    %390 = vmatprep.subr.mxu0 0.0
    %391 = vmatpush1.msra.mxu0 0.0
    %392 = vmatprep.subr.mxu0 0.0
    %393 = vmatpush1.msra.mxu0 0.0
    %394 = vmatprep.subr.mxu0 0.0
    %395 = vmatpush1.msra.mxu0 0.0
    %396 = vmatprep.subr.mxu0 0.0
    %397 = vmatpush1.msra.mxu0 0.0
    %398 = vmatprep.subr.mxu0 0.0
    %399 = vmatpush1.msra.mxu0 0.0
    %400 = vmatprep.subr.mxu0 0.0
    %401 = vmatpush1.msra.mxu0 0.0
    %402 = vmatprep.mubr.f32.mxu0 0.0
    %403 = vmatmul.mubr.f32.gmra.mrb[0].mxu0 %v333
    %v404 = vpop.f32.mrb[0].mxu0
    %v405 = vadd.f32 %v329, %v404
    %v406 = vpop.f32.mrb[0].mxu0
    %407 = vmatprep.mubr.f32.mxu0 0.0
    %408 = vmatmul.mubr.f32.gmra.mrb[0].mxu0 %v336
    %v409 = vpop.f32.mrb[0].mxu0
    %v410 = vadd.f32 %v329, %v409
    %v411 = vpop.f32.mrb[0].mxu0
    %412 = vdwg.mxu0
    %v413 = vtanh.pop %v405
    %v414 = vtanh.pop %v410
    %417 = vrot.lane.b32.xlu0 %v83, 32
    %v418 = vpop.permute.xlu0 %417
    %419 = vrot.lane.b32.xlu0 %v84, 32
    %v420 = vpop.permute.xlu0 %419
    %v423 = vsel %vm331, %v413, %v418
    %v424 = vsel %vm331, %v414, %v420
    %v426 = vlaneseq
    %v427 = vshrl.u32 %v426, 7
    %v428 = vsub.s32 0, %v427
    %v429 = vrot.slane %v71, %v428
    %vm431 = vcmask 523264
    %v433 = vsel %vm431, %v423, 0
    %v436 = vsel %vm431, %v424, 0
    %438 = vmatprep.subr.mxu0 0.0
    %439 = vmatpush1.msra.mxu0 %v63
    %440 = vmatprep.subr.mxu0 0.0
    %441 = vmatpush1.msra.mxu0 %v64
    %442 = vmatprep.subr.mxu0 0.0
    %443 = vmatpush1.msra.mxu0 %v65
    %444 = vmatprep.subr.mxu0 0.0
    %445 = vmatpush1.msra.mxu0 %v66
    %446 = vmatprep.subr.mxu0 0.0
    %447 = vmatpush1.msra.mxu0 %v67
    %448 = vmatprep.subr.mxu0 0.0
    %449 = vmatpush1.msra.mxu0 %v68
    %450 = vmatprep.subr.mxu0 0.0
    %451 = vmatpush1.msra.mxu0 %v69
    %452 = vmatprep.subr.mxu0 0.0
    %453 = vmatpush1.msra.mxu0 %v70
    %454 = vmatprep.subr.mxu0 0.0
    %455 = vmatpush1.msra.mxu0 0.0
    %456 = vmatprep.subr.mxu0 0.0
    %457 = vmatpush1.msra.mxu0 0.0
    %458 = vmatprep.subr.mxu0 0.0
    %459 = vmatpush1.msra.mxu0 0.0
    %460 = vmatprep.subr.mxu0 0.0
    %461 = vmatpush1.msra.mxu0 0.0
    %462 = vmatprep.subr.mxu0 0.0
    %463 = vmatpush1.msra.mxu0 0.0
    %464 = vmatprep.subr.mxu0 0.0
    %465 = vmatpush1.msra.mxu0 0.0
    %466 = vmatprep.subr.mxu0 0.0
    %467 = vmatpush1.msra.mxu0 0.0
    %468 = vmatprep.subr.mxu0 0.0
    %469 = vmatpush1.msra.mxu0 0.0
    %470 = vmatprep.subr.mxu0 0.0
    %471 = vmatpush1.msra.mxu0 0.0
    %472 = vmatprep.subr.mxu0 0.0
    %473 = vmatpush1.msra.mxu0 0.0
    %474 = vmatprep.subr.mxu0 0.0
    %475 = vmatpush1.msra.mxu0 0.0
    %476 = vmatprep.subr.mxu0 0.0
    %477 = vmatpush1.msra.mxu0 0.0
    %478 = vmatprep.subr.mxu0 0.0
    %479 = vmatpush1.msra.mxu0 0.0
    %480 = vmatprep.subr.mxu0 0.0
    %481 = vmatpush1.msra.mxu0 0.0
    %482 = vmatprep.subr.mxu0 0.0
    %483 = vmatpush1.msra.mxu0 0.0
    %484 = vmatprep.subr.mxu0 0.0
    %485 = vmatpush1.msra.mxu0 0.0
    %486 = vmatprep.subr.mxu0 0.0
    %487 = vmatpush1.msra.mxu0 0.0
    %488 = vmatprep.subr.mxu0 0.0
    %489 = vmatpush1.msra.mxu0 0.0
    %490 = vmatprep.subr.mxu0 0.0
    %491 = vmatpush1.msra.mxu0 0.0
    %492 = vmatprep.subr.mxu0 0.0
    %493 = vmatpush1.msra.mxu0 0.0
    %494 = vmatprep.subr.mxu0 0.0
    %495 = vmatpush1.msra.mxu0 0.0
    %496 = vmatprep.subr.mxu0 0.0
    %497 = vmatpush1.msra.mxu0 0.0
    %498 = vmatprep.subr.mxu0 0.0
    %499 = vmatpush1.msra.mxu0 0.0
    %500 = vmatprep.subr.mxu0 0.0
    %501 = vmatpush1.msra.mxu0 0.0
    %502 = vmatprep.mubr.f32.mxu0 0.0
    %503 = vmatmul.mubr.f32.gmra.mrb[0].mxu0 %v433
    %v504 = vpop.f32.mrb[0].mxu0
    %v505 = vadd.f32 %v429, %v504
    %v506 = vpop.f32.mrb[0].mxu0
    %507 = vmatprep.mubr.f32.mxu0 0.0
    %508 = vmatmul.mubr.f32.gmra.mrb[0].mxu0 %v436
    %v509 = vpop.f32.mrb[0].mxu0
    %v510 = vadd.f32 %v429, %v509
    %v511 = vpop.f32.mrb[0].mxu0
    %512 = vdwg.mxu0
    %v513 = vtanh.pop %v505
    %v514 = vtanh.pop %v510
    %s515 = scalar_lea.vmem %s0, 16
    %v516 = vld [vmem:[%s515] sm:$0xff]
    %v517 = vld [vmem:[%s515 + $0x8] sm:$0xff]
    %518 = vxpose.xlu0.b32.start [1/16] %v516, 128
    %519 = vxpose.xlu0.b32.cont [2/16] 0.0, 128
    %520 = vxpose.xlu0.b32.cont [3/16] 0.0, 128
    %521 = vxpose.xlu0.b32.cont [4/16] 0.0, 128
    %522 = vxpose.xlu0.b32.cont [5/16] 0.0, 128
    %523 = vxpose.xlu0.b32.cont [6/16] 0.0, 128
    %524 = vxpose.xlu0.b32.cont [7/16] 0.0, 128
    %525 = vxpose.xlu0.b32.cont [8/16] 0.0, 128
    %526 = vxpose.xlu0.b32.cont [9/16] 0.0, 128
    %527 = vxpose.xlu0.b32.cont [10/16] 0.0, 128
    %528 = vxpose.xlu0.b32.cont [11/16] 0.0, 128
    %529 = vxpose.xlu0.b32.cont [12/16] 0.0, 128
    %530 = vxpose.xlu0.b32.cont [13/16] 0.0, 128
    %531 = vxpose.xlu0.b32.cont [14/16] 0.0, 128
    %532 = vxpose.xlu0.b32.cont [15/16] 0.0, 128
    %533 = vxpose.xlu0.b32.end [16/16] 0.0, 128
    %v534 = vpop.trf.xlu0
    %v535 = vpop.trf.xlu0
    %v536 = vpop.trf.xlu0
    %v537 = vpop.trf.xlu0
    %v538 = vpop.trf.xlu0
    %v539 = vpop.trf.xlu0
    %v540 = vpop.trf.xlu0
    %v541 = vpop.trf.xlu0
    %v542 = vpop.trf.xlu0
    %v543 = vpop.trf.xlu0
    %v544 = vpop.trf.xlu0
    %v545 = vpop.trf.xlu0
    %v546 = vpop.trf.xlu0
    %v547 = vpop.trf.xlu0
    %v548 = vpop.trf.xlu0
    %v549 = vpop.trf.xlu0
    %550 = vxpose.xlu0.b32.start [1/16] %v517, 128
    %551 = vxpose.xlu0.b32.cont [2/16] 0.0, 128
    %552 = vxpose.xlu0.b32.cont [3/16] 0.0, 128
    %553 = vxpose.xlu0.b32.cont [4/16] 0.0, 128
    %554 = vxpose.xlu0.b32.cont [5/16] 0.0, 128
    %555 = vxpose.xlu0.b32.cont [6/16] 0.0, 128
    %556 = vxpose.xlu0.b32.cont [7/16] 0.0, 128
    %557 = vxpose.xlu0.b32.cont [8/16] 0.0, 128
    %558 = vxpose.xlu0.b32.cont [9/16] 0.0, 128
    %559 = vxpose.xlu0.b32.cont [10/16] 0.0, 128
    %560 = vxpose.xlu0.b32.cont [11/16] 0.0, 128
    %561 = vxpose.xlu0.b32.cont [12/16] 0.0, 128
    %562 = vxpose.xlu0.b32.cont [13/16] 0.0, 128
    %563 = vxpose.xlu0.b32.cont [14/16] 0.0, 128
    %564 = vxpose.xlu0.b32.cont [15/16] 0.0, 128
    %565 = vxpose.xlu0.b32.end [16/16] 0.0, 128
    %v566 = vpop.trf.xlu0
    %v567 = vpop.trf.xlu0
    %v568 = vpop.trf.xlu0
    %v569 = vpop.trf.xlu0
    %v570 = vpop.trf.xlu0
    %v571 = vpop.trf.xlu0
    %v572 = vpop.trf.xlu0
    %v573 = vpop.trf.xlu0
    %v574 = vpop.trf.xlu0
    %v575 = vpop.trf.xlu0
    %v576 = vpop.trf.xlu0
    %v577 = vpop.trf.xlu0
    %v578 = vpop.trf.xlu0
    %v579 = vpop.trf.xlu0
    %v580 = vpop.trf.xlu0
    %v581 = vpop.trf.xlu0
    %v583 = vsel %vm151, %v516, 0
    %v586 = vsel %vm151, %v517, 0
    %588 = vmatprep.subr.mxu0 0.0
    %589 = vmatpush1.msra.mxu0 %v51
    %590 = vmatprep.subr.mxu0 0.0
    %591 = vmatpush1.msra.mxu0 0.0
    %592 = vmatprep.subr.mxu0 0.0
    %593 = vmatpush1.msra.mxu0 0.0
    %594 = vmatprep.subr.mxu0 0.0
    %595 = vmatpush1.msra.mxu0 0.0
    %596 = vmatprep.subr.mxu0 0.0
    %597 = vmatpush1.msra.mxu0 0.0
    %598 = vmatprep.subr.mxu0 0.0
    %599 = vmatpush1.msra.mxu0 0.0
    %600 = vmatprep.subr.mxu0 0.0
    %601 = vmatpush1.msra.mxu0 0.0
    %602 = vmatprep.subr.mxu0 0.0
    %603 = vmatpush1.msra.mxu0 0.0
    %604 = vmatprep.subr.mxu0 0.0
    %605 = vmatpush1.msra.mxu0 0.0
    %606 = vmatprep.subr.mxu0 0.0
    %607 = vmatpush1.msra.mxu0 0.0
    %608 = vmatprep.subr.mxu0 0.0
    %609 = vmatpush1.msra.mxu0 0.0
    %610 = vmatprep.subr.mxu0 0.0
    %611 = vmatpush1.msra.mxu0 0.0
    %612 = vmatprep.subr.mxu0 0.0
    %613 = vmatpush1.msra.mxu0 0.0
    %614 = vmatprep.subr.mxu0 0.0
    %615 = vmatpush1.msra.mxu0 0.0
    %616 = vmatprep.subr.mxu0 0.0
    %617 = vmatpush1.msra.mxu0 0.0
    %618 = vmatprep.subr.mxu0 0.0
    %619 = vmatpush1.msra.mxu0 0.0
    %620 = vmatprep.subr.mxu0 0.0
    %621 = vmatpush1.msra.mxu0 0.0
    %622 = vmatprep.subr.mxu0 0.0
    %623 = vmatpush1.msra.mxu0 0.0
    %624 = vmatprep.subr.mxu0 0.0
    %625 = vmatpush1.msra.mxu0 0.0
    %626 = vmatprep.subr.mxu0 0.0
    %627 = vmatpush1.msra.mxu0 0.0
    %628 = vmatprep.subr.mxu0 0.0
    %629 = vmatpush1.msra.mxu0 0.0
    %630 = vmatprep.subr.mxu0 0.0
    %631 = vmatpush1.msra.mxu0 0.0
    %632 = vmatprep.subr.mxu0 0.0
    %633 = vmatpush1.msra.mxu0 0.0
    %634 = vmatprep.subr.mxu0 0.0
    %635 = vmatpush1.msra.mxu0 0.0
    %636 = vmatprep.subr.mxu0 0.0
    %637 = vmatpush1.msra.mxu0 0.0
    %638 = vmatprep.subr.mxu0 0.0
    %639 = vmatpush1.msra.mxu0 0.0
    %640 = vmatprep.subr.mxu0 0.0
    %641 = vmatpush1.msra.mxu0 0.0
    %642 = vmatprep.subr.mxu0 0.0
    %643 = vmatpush1.msra.mxu0 0.0
    %644 = vmatprep.subr.mxu0 0.0
    %645 = vmatpush1.msra.mxu0 0.0
    %646 = vmatprep.subr.mxu0 0.0
    %647 = vmatpush1.msra.mxu0 0.0
    %648 = vmatprep.subr.mxu0 0.0
    %649 = vmatpush1.msra.mxu0 0.0
    %650 = vmatprep.subr.mxu0 0.0
    %651 = vmatpush1.msra.mxu0 0.0
    %652 = vmatprep.mubr.f32.mxu0 0.0
    %653 = vmatmul.mubr.f32.gmra.mrb[0].mxu0 %v583
    %v654 = vpop.f32.mrb[0].mxu0
    %v655 = vadd.f32 0.0, %v654
    %v656 = vpop.f32.mrb[0].mxu0
    %657 = vmatprep.mubr.f32.mxu0 0.0
    %658 = vmatmul.mubr.f32.gmra.mrb[0].mxu0 %v586
    %v659 = vpop.f32.mrb[0].mxu0
    %v660 = vadd.f32 0.0, %v659
    %v661 = vpop.f32.mrb[0].mxu0
    %662 = vdwg.mxu0
    %v664 = vsel %vm151, %v534, 0
    %v667 = vsel %vm151, %v566, 0
    %669 = vmatprep.subr.mxu0 0.0
    %670 = vmatpush1.msra.mxu0 %v51
    %671 = vmatprep.subr.mxu0 0.0
    %672 = vmatpush1.msra.mxu0 0.0
    %673 = vmatprep.subr.mxu0 0.0
    %674 = vmatpush1.msra.mxu0 0.0
    %675 = vmatprep.subr.mxu0 0.0
    %676 = vmatpush1.msra.mxu0 0.0
    %677 = vmatprep.subr.mxu0 0.0
    %678 = vmatpush1.msra.mxu0 0.0
    %679 = vmatprep.subr.mxu0 0.0
    %680 = vmatpush1.msra.mxu0 0.0
    %681 = vmatprep.subr.mxu0 0.0
    %682 = vmatpush1.msra.mxu0 0.0
    %683 = vmatprep.subr.mxu0 0.0
    %684 = vmatpush1.msra.mxu0 0.0
    %685 = vmatprep.subr.mxu0 0.0
    %686 = vmatpush1.msra.mxu0 0.0
    %687 = vmatprep.subr.mxu0 0.0
    %688 = vmatpush1.msra.mxu0 0.0
    %689 = vmatprep.subr.mxu0 0.0
    %690 = vmatpush1.msra.mxu0 0.0
    %691 = vmatprep.subr.mxu0 0.0
    %692 = vmatpush1.msra.mxu0 0.0
    %693 = vmatprep.subr.mxu0 0.0
    %694 = vmatpush1.msra.mxu0 0.0
    %695 = vmatprep.subr.mxu0 0.0
    %696 = vmatpush1.msra.mxu0 0.0
    %697 = vmatprep.subr.mxu0 0.0
    %698 = vmatpush1.msra.mxu0 0.0
    %699 = vmatprep.subr.mxu0 0.0
    %700 = vmatpush1.msra.mxu0 0.0
    %701 = vmatprep.subr.mxu0 0.0
    %702 = vmatpush1.msra.mxu0 0.0
    %703 = vmatprep.subr.mxu0 0.0
    %704 = vmatpush1.msra.mxu0 0.0
    %705 = vmatprep.subr.mxu0 0.0
    %706 = vmatpush1.msra.mxu0 0.0
    %707 = vmatprep.subr.mxu0 0.0
    %708 = vmatpush1.msra.mxu0 0.0
    %709 = vmatprep.subr.mxu0 0.0
    %710 = vmatpush1.msra.mxu0 0.0
    %711 = vmatprep.subr.mxu0 0.0
    %712 = vmatpush1.msra.mxu0 0.0
    %713 = vmatprep.subr.mxu0 0.0
    %714 = vmatpush1.msra.mxu0 0.0
    %715 = vmatprep.subr.mxu0 0.0
    %716 = vmatpush1.msra.mxu0 0.0
    %717 = vmatprep.subr.mxu0 0.0
    %718 = vmatpush1.msra.mxu0 0.0
    %719 = vmatprep.subr.mxu0 0.0
    %720 = vmatpush1.msra.mxu0 0.0
    %721 = vmatprep.subr.mxu0 0.0
    %722 = vmatpush1.msra.mxu0 0.0
    %723 = vmatprep.subr.mxu0 0.0
    %724 = vmatpush1.msra.mxu0 0.0
    %725 = vmatprep.subr.mxu0 0.0
    %726 = vmatpush1.msra.mxu0 0.0
    %727 = vmatprep.subr.mxu0 0.0
    %728 = vmatpush1.msra.mxu0 0.0
    %729 = vmatprep.subr.mxu0 0.0
    %730 = vmatpush1.msra.mxu0 0.0
    %731 = vmatprep.subr.mxu0 0.0
    %732 = vmatpush1.msra.mxu0 0.0
    %733 = vmatprep.mubr.f32.mxu0 0.0
    %734 = vmatmul.mubr.f32.gmra.mrb[0].mxu0 %v664
    %v735 = vpop.f32.mrb[0].mxu0
    %v736 = vadd.f32 0.0, %v735
    %v737 = vpop.f32.mrb[0].mxu0
    %738 = vmatprep.mubr.f32.mxu0 0.0
    %739 = vmatmul.mubr.f32.gmra.mrb[0].mxu0 %v667
    %v740 = vpop.f32.mrb[0].mxu0
    %v741 = vadd.f32 0.0, %v740
    %v742 = vpop.f32.mrb[0].mxu0
    %743 = vdwg.mxu0
    %746 = vrot.lane.b32.xlu0 %v736, 16
    %v747 = vpop.permute.xlu0 %746
    %748 = vrot.lane.b32.xlu0 %v741, 16
    %v749 = vpop.permute.xlu0 %748
    %v752 = vsel %vm322, %v655, %v747
    %v753 = vsel %vm322, %v660, %v749
    %v755 = vsel %vm331, %v752, 0
    %v758 = vsel %vm331, %v753, 0
    %760 = vmatprep.subr.mxu0 0.0
    %761 = vmatpush1.msra.mxu0 %v53
    %762 = vmatprep.subr.mxu0 0.0
    %763 = vmatpush1.msra.mxu0 %v54
    %764 = vmatprep.subr.mxu0 0.0
    %765 = vmatpush1.msra.mxu0 %v55
    %766 = vmatprep.subr.mxu0 0.0
    %767 = vmatpush1.msra.mxu0 %v56
    %768 = vmatprep.subr.mxu0 0.0
    %769 = vmatpush1.msra.mxu0 0.0
    %770 = vmatprep.subr.mxu0 0.0
    %771 = vmatpush1.msra.mxu0 0.0
    %772 = vmatprep.subr.mxu0 0.0
    %773 = vmatpush1.msra.mxu0 0.0
    %774 = vmatprep.subr.mxu0 0.0
    %775 = vmatpush1.msra.mxu0 0.0
    %776 = vmatprep.subr.mxu0 0.0
    %777 = vmatpush1.msra.mxu0 0.0
    %778 = vmatprep.subr.mxu0 0.0
    %779 = vmatpush1.msra.mxu0 0.0
    %780 = vmatprep.subr.mxu0 0.0
    %781 = vmatpush1.msra.mxu0 0.0
    %782 = vmatprep.subr.mxu0 0.0
    %783 = vmatpush1.msra.mxu0 0.0
    %784 = vmatprep.subr.mxu0 0.0
    %785 = vmatpush1.msra.mxu0 0.0
    %786 = vmatprep.subr.mxu0 0.0
    %787 = vmatpush1.msra.mxu0 0.0
    %788 = vmatprep.subr.mxu0 0.0
    %789 = vmatpush1.msra.mxu0 0.0
    %790 = vmatprep.subr.mxu0 0.0
    %791 = vmatpush1.msra.mxu0 0.0
    %792 = vmatprep.subr.mxu0 0.0
    %793 = vmatpush1.msra.mxu0 0.0
    %794 = vmatprep.subr.mxu0 0.0
    %795 = vmatpush1.msra.mxu0 0.0
    %796 = vmatprep.subr.mxu0 0.0
    %797 = vmatpush1.msra.mxu0 0.0
    %798 = vmatprep.subr.mxu0 0.0
    %799 = vmatpush1.msra.mxu0 0.0
    %800 = vmatprep.subr.mxu0 0.0
    %801 = vmatpush1.msra.mxu0 0.0
    %802 = vmatprep.subr.mxu0 0.0
    %803 = vmatpush1.msra.mxu0 0.0
    %804 = vmatprep.subr.mxu0 0.0
    %805 = vmatpush1.msra.mxu0 0.0
    %806 = vmatprep.subr.mxu0 0.0
    %807 = vmatpush1.msra.mxu0 0.0
    %808 = vmatprep.subr.mxu0 0.0
    %809 = vmatpush1.msra.mxu0 0.0
    %810 = vmatprep.subr.mxu0 0.0
    %811 = vmatpush1.msra.mxu0 0.0
    %812 = vmatprep.subr.mxu0 0.0
    %813 = vmatpush1.msra.mxu0 0.0
    %814 = vmatprep.subr.mxu0 0.0
    %815 = vmatpush1.msra.mxu0 0.0
    %816 = vmatprep.subr.mxu0 0.0
    %817 = vmatpush1.msra.mxu0 0.0
    %818 = vmatprep.subr.mxu0 0.0
    %819 = vmatpush1.msra.mxu0 0.0
    %820 = vmatprep.subr.mxu0 0.0
    %821 = vmatpush1.msra.mxu0 0.0
    %822 = vmatprep.subr.mxu0 0.0
    %823 = vmatpush1.msra.mxu0 0.0
    %824 = vmatprep.mubr.f32.mxu0 0.0
    %825 = vmatmul.mubr.f32.gmra.mrb[0].mxu0 %v755
    %v826 = vpop.f32.mrb[0].mxu0
    %v827 = vadd.f32 %v329, %v826
    %v828 = vpop.f32.mrb[0].mxu0
    %829 = vmatprep.mubr.f32.mxu0 0.0
    %830 = vmatmul.mubr.f32.gmra.mrb[0].mxu0 %v758
    %v831 = vpop.f32.mrb[0].mxu0
    %v832 = vadd.f32 %v329, %v831
    %v833 = vpop.f32.mrb[0].mxu0
    %834 = vdwg.mxu0
    %v835 = vtanh.pop %v827
    %v836 = vtanh.pop %v832
    %839 = vrot.lane.b32.xlu0 %v513, 32
    %v840 = vpop.permute.xlu0 %839
    %841 = vrot.lane.b32.xlu0 %v514, 32
    %v842 = vpop.permute.xlu0 %841
    %v845 = vsel %vm331, %v835, %v840
    %v846 = vsel %vm331, %v836, %v842
    %v848 = vsel %vm431, %v845, 0
    %v851 = vsel %vm431, %v846, 0
    %853 = vmatprep.subr.mxu0 0.0
    %854 = vmatpush1.msra.mxu0 %v63
    %855 = vmatprep.subr.mxu0 0.0
    %856 = vmatpush1.msra.mxu0 %v64
    %857 = vmatprep.subr.mxu0 0.0
    %858 = vmatpush1.msra.mxu0 %v65
    %859 = vmatprep.subr.mxu0 0.0
    %860 = vmatpush1.msra.mxu0 %v66
    %861 = vmatprep.subr.mxu0 0.0
    %862 = vmatpush1.msra.mxu0 %v67
    %863 = vmatprep.subr.mxu0 0.0
    %864 = vmatpush1.msra.mxu0 %v68
    %865 = vmatprep.subr.mxu0 0.0
    %866 = vmatpush1.msra.mxu0 %v69
    %867 = vmatprep.subr.mxu0 0.0
    %868 = vmatpush1.msra.mxu0 %v70
    %869 = vmatprep.subr.mxu0 0.0
    %870 = vmatpush1.msra.mxu0 0.0
    %871 = vmatprep.subr.mxu0 0.0
    %872 = vmatpush1.msra.mxu0 0.0
    %873 = vmatprep.subr.mxu0 0.0
    %874 = vmatpush1.msra.mxu0 0.0
    %875 = vmatprep.subr.mxu0 0.0
    %876 = vmatpush1.msra.mxu0 0.0
    %877 = vmatprep.subr.mxu0 0.0
    %878 = vmatpush1.msra.mxu0 0.0
    %879 = vmatprep.subr.mxu0 0.0
    %880 = vmatpush1.msra.mxu0 0.0
    %881 = vmatprep.subr.mxu0 0.0
    %882 = vmatpush1.msra.mxu0 0.0
    %883 = vmatprep.subr.mxu0 0.0
    %884 = vmatpush1.msra.mxu0 0.0
    %885 = vmatprep.subr.mxu0 0.0
    %886 = vmatpush1.msra.mxu0 0.0
    %887 = vmatprep.subr.mxu0 0.0
    %888 = vmatpush1.msra.mxu0 0.0
    %889 = vmatprep.subr.mxu0 0.0
    %890 = vmatpush1.msra.mxu0 0.0
    %891 = vmatprep.subr.mxu0 0.0
    %892 = vmatpush1.msra.mxu0 0.0
    %893 = vmatprep.subr.mxu0 0.0
    %894 = vmatpush1.msra.mxu0 0.0
    %895 = vmatprep.subr.mxu0 0.0
    %896 = vmatpush1.msra.mxu0 0.0
    %897 = vmatprep.subr.mxu0 0.0
    %898 = vmatpush1.msra.mxu0 0.0
    %899 = vmatprep.subr.mxu0 0.0
    %900 = vmatpush1.msra.mxu0 0.0
    %901 = vmatprep.subr.mxu0 0.0
    %902 = vmatpush1.msra.mxu0 0.0
    %903 = vmatprep.subr.mxu0 0.0
    %904 = vmatpush1.msra.mxu0 0.0
    %905 = vmatprep.subr.mxu0 0.0
    %906 = vmatpush1.msra.mxu0 0.0
    %907 = vmatprep.subr.mxu0 0.0
    %908 = vmatpush1.msra.mxu0 0.0
    %909 = vmatprep.subr.mxu0 0.0
    %910 = vmatpush1.msra.mxu0 0.0
    %911 = vmatprep.subr.mxu0 0.0
    %912 = vmatpush1.msra.mxu0 0.0
    %913 = vmatprep.subr.mxu0 0.0
    %914 = vmatpush1.msra.mxu0 0.0
    %915 = vmatprep.subr.mxu0 0.0
    %916 = vmatpush1.msra.mxu0 0.0
    %917 = vmatprep.mubr.f32.mxu0 0.0
    %918 = vmatmul.mubr.f32.gmra.mrb[0].mxu0 %v848
    %v919 = vpop.f32.mrb[0].mxu0
    %v920 = vadd.f32 %v429, %v919
    %v921 = vpop.f32.mrb[0].mxu0
    %922 = vmatprep.mubr.f32.mxu0 0.0
    %923 = vmatmul.mubr.f32.gmra.mrb[0].mxu0 %v851
    %v924 = vpop.f32.mrb[0].mxu0
    %v925 = vadd.f32 %v429, %v924
    %v926 = vpop.f32.mrb[0].mxu0
    %927 = vdwg.mxu0
    %v928 = vtanh.pop %v920
    %v929 = vtanh.pop %v925
    %s930 = scalar_lea.vmem %s0, 32
    %v931 = vld [vmem:[%s930] sm:$0xff]
    %v932 = vld [vmem:[%s930 + $0x8] sm:$0xff]
    %933 = vxpose.xlu0.b32.start [1/16] %v931, 128
    %934 = vxpose.xlu0.b32.cont [2/16] 0.0, 128
    %935 = vxpose.xlu0.b32.cont [3/16] 0.0, 128
    %936 = vxpose.xlu0.b32.cont [4/16] 0.0, 128
    %937 = vxpose.xlu0.b32.cont [5/16] 0.0, 128
    %938 = vxpose.xlu0.b32.cont [6/16] 0.0, 128
    %939 = vxpose.xlu0.b32.cont [7/16] 0.0, 128
    %940 = vxpose.xlu0.b32.cont [8/16] 0.0, 128
    %941 = vxpose.xlu0.b32.cont [9/16] 0.0, 128
    %942 = vxpose.xlu0.b32.cont [10/16] 0.0, 128
    %943 = vxpose.xlu0.b32.cont [11/16] 0.0, 128
    %944 = vxpose.xlu0.b32.cont [12/16] 0.0, 128
    %945 = vxpose.xlu0.b32.cont [13/16] 0.0, 128
    %946 = vxpose.xlu0.b32.cont [14/16] 0.0, 128
    %947 = vxpose.xlu0.b32.cont [15/16] 0.0, 128
    %948 = vxpose.xlu0.b32.end [16/16] 0.0, 128
    %v949 = vpop.trf.xlu0
    %v950 = vpop.trf.xlu0
    %v951 = vpop.trf.xlu0
    %v952 = vpop.trf.xlu0
    %v953 = vpop.trf.xlu0
    %v954 = vpop.trf.xlu0
    %v955 = vpop.trf.xlu0
    %v956 = vpop.trf.xlu0
    %v957 = vpop.trf.xlu0
    %v958 = vpop.trf.xlu0
    %v959 = vpop.trf.xlu0
    %v960 = vpop.trf.xlu0
    %v961 = vpop.trf.xlu0
    %v962 = vpop.trf.xlu0
    %v963 = vpop.trf.xlu0
    %v964 = vpop.trf.xlu0
    %965 = vxpose.xlu0.b32.start [1/16] %v932, 128
    %966 = vxpose.xlu0.b32.cont [2/16] 0.0, 128
    %967 = vxpose.xlu0.b32.cont [3/16] 0.0, 128
    %968 = vxpose.xlu0.b32.cont [4/16] 0.0, 128
    %969 = vxpose.xlu0.b32.cont [5/16] 0.0, 128
    %970 = vxpose.xlu0.b32.cont [6/16] 0.0, 128
    %971 = vxpose.xlu0.b32.cont [7/16] 0.0, 128
    %972 = vxpose.xlu0.b32.cont [8/16] 0.0, 128
    %973 = vxpose.xlu0.b32.cont [9/16] 0.0, 128
    %974 = vxpose.xlu0.b32.cont [10/16] 0.0, 128
    %975 = vxpose.xlu0.b32.cont [11/16] 0.0, 128
    %976 = vxpose.xlu0.b32.cont [12/16] 0.0, 128
    %977 = vxpose.xlu0.b32.cont [13/16] 0.0, 128
    %978 = vxpose.xlu0.b32.cont [14/16] 0.0, 128
    %979 = vxpose.xlu0.b32.cont [15/16] 0.0, 128
    %980 = vxpose.xlu0.b32.end [16/16] 0.0, 128
    %v981 = vpop.trf.xlu0
    %v982 = vpop.trf.xlu0
    %v983 = vpop.trf.xlu0
    %v984 = vpop.trf.xlu0
    %v985 = vpop.trf.xlu0
    %v986 = vpop.trf.xlu0
    %v987 = vpop.trf.xlu0
    %v988 = vpop.trf.xlu0
    %v989 = vpop.trf.xlu0
    %v990 = vpop.trf.xlu0
    %v991 = vpop.trf.xlu0
    %v992 = vpop.trf.xlu0
    %v993 = vpop.trf.xlu0
    %v994 = vpop.trf.xlu0
    %v995 = vpop.trf.xlu0
    %v996 = vpop.trf.xlu0
    %v998 = vsel %vm151, %v931, 0
    %v1001 = vsel %vm151, %v932, 0
    %1003 = vmatprep.subr.mxu0 0.0
    %1004 = vmatpush1.msra.mxu0 %v51
    %1005 = vmatprep.subr.mxu0 0.0
    %1006 = vmatpush1.msra.mxu0 0.0
    %1007 = vmatprep.subr.mxu0 0.0
    %1008 = vmatpush1.msra.mxu0 0.0
    %1009 = vmatprep.subr.mxu0 0.0
    %1010 = vmatpush1.msra.mxu0 0.0
    %1011 = vmatprep.subr.mxu0 0.0
    %1012 = vmatpush1.msra.mxu0 0.0
    %1013 = vmatprep.subr.mxu0 0.0
    %1014 = vmatpush1.msra.mxu0 0.0
    %1015 = vmatprep.subr.mxu0 0.0
    %1016 = vmatpush1.msra.mxu0 0.0
    %1017 = vmatprep.subr.mxu0 0.0
    %1018 = vmatpush1.msra.mxu0 0.0
    %1019 = vmatprep.subr.mxu0 0.0
    %1020 = vmatpush1.msra.mxu0 0.0
    %1021 = vmatprep.subr.mxu0 0.0
    %1022 = vmatpush1.msra.mxu0 0.0
    %1023 = vmatprep.subr.mxu0 0.0
    %1024 = vmatpush1.msra.mxu0 0.0
    %1025 = vmatprep.subr.mxu0 0.0
    %1026 = vmatpush1.msra.mxu0 0.0
    %1027 = vmatprep.subr.mxu0 0.0
    %1028 = vmatpush1.msra.mxu0 0.0
    %1029 = vmatprep.subr.mxu0 0.0
    %1030 = vmatpush1.msra.mxu0 0.0
    %1031 = vmatprep.subr.mxu0 0.0
    %1032 = vmatpush1.msra.mxu0 0.0
    %1033 = vmatprep.subr.mxu0 0.0
    %1034 = vmatpush1.msra.mxu0 0.0
    %1035 = vmatprep.subr.mxu0 0.0
    %1036 = vmatpush1.msra.mxu0 0.0
    %1037 = vmatprep.subr.mxu0 0.0
    %1038 = vmatpush1.msra.mxu0 0.0
    %1039 = vmatprep.subr.mxu0 0.0
    %1040 = vmatpush1.msra.mxu0 0.0
    %1041 = vmatprep.subr.mxu0 0.0
    %1042 = vmatpush1.msra.mxu0 0.0
    %1043 = vmatprep.subr.mxu0 0.0
    %1044 = vmatpush1.msra.mxu0 0.0
    %1045 = vmatprep.subr.mxu0 0.0
    %1046 = vmatpush1.msra.mxu0 0.0
    %1047 = vmatprep.subr.mxu0 0.0
    %1048 = vmatpush1.msra.mxu0 0.0
    %1049 = vmatprep.subr.mxu0 0.0
    %1050 = vmatpush1.msra.mxu0 0.0
    %1051 = vmatprep.subr.mxu0 0.0
    %1052 = vmatpush1.msra.mxu0 0.0
    %1053 = vmatprep.subr.mxu0 0.0
    %1054 = vmatpush1.msra.mxu0 0.0
    %1055 = vmatprep.subr.mxu0 0.0
    %1056 = vmatpush1.msra.mxu0 0.0
    %1057 = vmatprep.subr.mxu0 0.0
    %1058 = vmatpush1.msra.mxu0 0.0
    %1059 = vmatprep.subr.mxu0 0.0
    %1060 = vmatpush1.msra.mxu0 0.0
    %1061 = vmatprep.subr.mxu0 0.0
    %1062 = vmatpush1.msra.mxu0 0.0
    %1063 = vmatprep.subr.mxu0 0.0
    %1064 = vmatpush1.msra.mxu0 0.0
    %1065 = vmatprep.subr.mxu0 0.0
    %1066 = vmatpush1.msra.mxu0 0.0
    %1067 = vmatprep.mubr.f32.mxu0 0.0
    %1068 = vmatmul.mubr.f32.gmra.mrb[0].mxu0 %v998
    %v1069 = vpop.f32.mrb[0].mxu0
    %v1070 = vadd.f32 0.0, %v1069
    %v1071 = vpop.f32.mrb[0].mxu0
    %1072 = vmatprep.mubr.f32.mxu0 0.0
    %1073 = vmatmul.mubr.f32.gmra.mrb[0].mxu0 %v1001
    %v1074 = vpop.f32.mrb[0].mxu0
    %v1075 = vadd.f32 0.0, %v1074
    %v1076 = vpop.f32.mrb[0].mxu0
    %1077 = vdwg.mxu0
    %v1079 = vsel %vm151, %v949, 0
    %v1082 = vsel %vm151, %v981, 0
    %1084 = vmatprep.subr.mxu0 0.0
    %1085 = vmatpush1.msra.mxu0 %v51
    %1086 = vmatprep.subr.mxu0 0.0
    %1087 = vmatpush1.msra.mxu0 0.0
    %1088 = vmatprep.subr.mxu0 0.0
    %1089 = vmatpush1.msra.mxu0 0.0
    %1090 = vmatprep.subr.mxu0 0.0
    %1091 = vmatpush1.msra.mxu0 0.0
    %1092 = vmatprep.subr.mxu0 0.0
    %1093 = vmatpush1.msra.mxu0 0.0
    %1094 = vmatprep.subr.mxu0 0.0
    %1095 = vmatpush1.msra.mxu0 0.0
    %1096 = vmatprep.subr.mxu0 0.0
    %1097 = vmatpush1.msra.mxu0 0.0
    %1098 = vmatprep.subr.mxu0 0.0
    %1099 = vmatpush1.msra.mxu0 0.0
    %1100 = vmatprep.subr.mxu0 0.0
    %1101 = vmatpush1.msra.mxu0 0.0
    %1102 = vmatprep.subr.mxu0 0.0
    %1103 = vmatpush1.msra.mxu0 0.0
    %1104 = vmatprep.subr.mxu0 0.0
    %1105 = vmatpush1.msra.mxu0 0.0
    %1106 = vmatprep.subr.mxu0 0.0
    %1107 = vmatpush1.msra.mxu0 0.0
    %1108 = vmatprep.subr.mxu0 0.0
    %1109 = vmatpush1.msra.mxu0 0.0
    %1110 = vmatprep.subr.mxu0 0.0
    %1111 = vmatpush1.msra.mxu0 0.0
    %1112 = vmatprep.subr.mxu0 0.0
    %1113 = vmatpush1.msra.mxu0 0.0
    %1114 = vmatprep.subr.mxu0 0.0
    %1115 = vmatpush1.msra.mxu0 0.0
    %1116 = vmatprep.subr.mxu0 0.0
    %1117 = vmatpush1.msra.mxu0 0.0
    %1118 = vmatprep.subr.mxu0 0.0
    %1119 = vmatpush1.msra.mxu0 0.0
    %1120 = vmatprep.subr.mxu0 0.0
    %1121 = vmatpush1.msra.mxu0 0.0
    %1122 = vmatprep.subr.mxu0 0.0
    %1123 = vmatpush1.msra.mxu0 0.0
    %1124 = vmatprep.subr.mxu0 0.0
    %1125 = vmatpush1.msra.mxu0 0.0
    %1126 = vmatprep.subr.mxu0 0.0
    %1127 = vmatpush1.msra.mxu0 0.0
    %1128 = vmatprep.subr.mxu0 0.0
    %1129 = vmatpush1.msra.mxu0 0.0
    %1130 = vmatprep.subr.mxu0 0.0
    %1131 = vmatpush1.msra.mxu0 0.0
    %1132 = vmatprep.subr.mxu0 0.0
    %1133 = vmatpush1.msra.mxu0 0.0
    %1134 = vmatprep.subr.mxu0 0.0
    %1135 = vmatpush1.msra.mxu0 0.0
    %1136 = vmatprep.subr.mxu0 0.0
    %1137 = vmatpush1.msra.mxu0 0.0
    %1138 = vmatprep.subr.mxu0 0.0
    %1139 = vmatpush1.msra.mxu0 0.0
    %1140 = vmatprep.subr.mxu0 0.0
    %1141 = vmatpush1.msra.mxu0 0.0
    %1142 = vmatprep.subr.mxu0 0.0
    %1143 = vmatpush1.msra.mxu0 0.0
    %1144 = vmatprep.subr.mxu0 0.0
    %1145 = vmatpush1.msra.mxu0 0.0
    %1146 = vmatprep.subr.mxu0 0.0
    %1147 = vmatpush1.msra.mxu0 0.0
    %1148 = vmatprep.mubr.f32.mxu0 0.0
    %1149 = vmatmul.mubr.f32.gmra.mrb[0].mxu0 %v1079
    %v1150 = vpop.f32.mrb[0].mxu0
    %v1151 = vadd.f32 0.0, %v1150
    %v1152 = vpop.f32.mrb[0].mxu0
    %1153 = vmatprep.mubr.f32.mxu0 0.0
    %1154 = vmatmul.mubr.f32.gmra.mrb[0].mxu0 %v1082
    %v1155 = vpop.f32.mrb[0].mxu0
    %v1156 = vadd.f32 0.0, %v1155
    %v1157 = vpop.f32.mrb[0].mxu0
    %1158 = vdwg.mxu0
    %1161 = vrot.lane.b32.xlu0 %v1151, 16
    %v1162 = vpop.permute.xlu0 %1161
    %1163 = vrot.lane.b32.xlu0 %v1156, 16
    %v1164 = vpop.permute.xlu0 %1163
    %v1167 = vsel %vm322, %v1070, %v1162
    %v1168 = vsel %vm322, %v1075, %v1164
    %v1170 = vsel %vm331, %v1167, 0
    %v1173 = vsel %vm331, %v1168, 0
    %1175 = vmatprep.subr.mxu0 0.0
    %1176 = vmatpush1.msra.mxu0 %v53
    %1177 = vmatprep.subr.mxu0 0.0
    %1178 = vmatpush1.msra.mxu0 %v54
    %1179 = vmatprep.subr.mxu0 0.0
    %1180 = vmatpush1.msra.mxu0 %v55
    %1181 = vmatprep.subr.mxu0 0.0
    %1182 = vmatpush1.msra.mxu0 %v56
    %1183 = vmatprep.subr.mxu0 0.0
    %1184 = vmatpush1.msra.mxu0 0.0
    %1185 = vmatprep.subr.mxu0 0.0
    %1186 = vmatpush1.msra.mxu0 0.0
    %1187 = vmatprep.subr.mxu0 0.0
    %1188 = vmatpush1.msra.mxu0 0.0
    %1189 = vmatprep.subr.mxu0 0.0
    %1190 = vmatpush1.msra.mxu0 0.0
    %1191 = vmatprep.subr.mxu0 0.0
    %1192 = vmatpush1.msra.mxu0 0.0
    %1193 = vmatprep.subr.mxu0 0.0
    %1194 = vmatpush1.msra.mxu0 0.0
    %1195 = vmatprep.subr.mxu0 0.0
    %1196 = vmatpush1.msra.mxu0 0.0
    %1197 = vmatprep.subr.mxu0 0.0
    %1198 = vmatpush1.msra.mxu0 0.0
    %1199 = vmatprep.subr.mxu0 0.0
    %1200 = vmatpush1.msra.mxu0 0.0
    %1201 = vmatprep.subr.mxu0 0.0
    %1202 = vmatpush1.msra.mxu0 0.0
    %1203 = vmatprep.subr.mxu0 0.0
    %1204 = vmatpush1.msra.mxu0 0.0
    %1205 = vmatprep.subr.mxu0 0.0
    %1206 = vmatpush1.msra.mxu0 0.0
    %1207 = vmatprep.subr.mxu0 0.0
    %1208 = vmatpush1.msra.mxu0 0.0
    %1209 = vmatprep.subr.mxu0 0.0
    %1210 = vmatpush1.msra.mxu0 0.0
    %1211 = vmatprep.subr.mxu0 0.0
    %1212 = vmatpush1.msra.mxu0 0.0
    %1213 = vmatprep.subr.mxu0 0.0
    %1214 = vmatpush1.msra.mxu0 0.0
    %1215 = vmatprep.subr.mxu0 0.0
    %1216 = vmatpush1.msra.mxu0 0.0
    %1217 = vmatprep.subr.mxu0 0.0
    %1218 = vmatpush1.msra.mxu0 0.0
    %1219 = vmatprep.subr.mxu0 0.0
    %1220 = vmatpush1.msra.mxu0 0.0
    %1221 = vmatprep.subr.mxu0 0.0
    %1222 = vmatpush1.msra.mxu0 0.0
    %1223 = vmatprep.subr.mxu0 0.0
    %1224 = vmatpush1.msra.mxu0 0.0
    %1225 = vmatprep.subr.mxu0 0.0
    %1226 = vmatpush1.msra.mxu0 0.0
    %1227 = vmatprep.subr.mxu0 0.0
    %1228 = vmatpush1.msra.mxu0 0.0
    %1229 = vmatprep.subr.mxu0 0.0
    %1230 = vmatpush1.msra.mxu0 0.0
    %1231 = vmatprep.subr.mxu0 0.0
    %1232 = vmatpush1.msra.mxu0 0.0
    %1233 = vmatprep.subr.mxu0 0.0
    %1234 = vmatpush1.msra.mxu0 0.0
    %1235 = vmatprep.subr.mxu0 0.0
    %1236 = vmatpush1.msra.mxu0 0.0
    %1237 = vmatprep.subr.mxu0 0.0
    %1238 = vmatpush1.msra.mxu0 0.0
    %1239 = vmatprep.mubr.f32.mxu0 0.0
    %1240 = vmatmul.mubr.f32.gmra.mrb[0].mxu0 %v1170
    %v1241 = vpop.f32.mrb[0].mxu0
    %v1242 = vadd.f32 %v329, %v1241
    %v1243 = vpop.f32.mrb[0].mxu0
    %1244 = vmatprep.mubr.f32.mxu0 0.0
    %1245 = vmatmul.mubr.f32.gmra.mrb[0].mxu0 %v1173
    %v1246 = vpop.f32.mrb[0].mxu0
    %v1247 = vadd.f32 %v329, %v1246
    %v1248 = vpop.f32.mrb[0].mxu0
    %1249 = vdwg.mxu0
    %v1250 = vtanh.pop %v1242
    %v1251 = vtanh.pop %v1247
    %1254 = vrot.lane.b32.xlu0 %v928, 32
    %v1255 = vpop.permute.xlu0 %1254
    %1256 = vrot.lane.b32.xlu0 %v929, 32
    %v1257 = vpop.permute.xlu0 %1256
    %v1260 = vsel %vm331, %v1250, %v1255
    %v1261 = vsel %vm331, %v1251, %v1257
    %v1263 = vsel %vm431, %v1260, 0
    %v1266 = vsel %vm431, %v1261, 0
    %1268 = vmatprep.subr.mxu0 0.0
    %1269 = vmatpush1.msra.mxu0 %v63
    %1270 = vmatprep.subr.mxu0 0.0
    %1271 = vmatpush1.msra.mxu0 %v64
    %1272 = vmatprep.subr.mxu0 0.0
    %1273 = vmatpush1.msra.mxu0 %v65
    %1274 = vmatprep.subr.mxu0 0.0
    %1275 = vmatpush1.msra.mxu0 %v66
    %1276 = vmatprep.subr.mxu0 0.0
    %1277 = vmatpush1.msra.mxu0 %v67
    %1278 = vmatprep.subr.mxu0 0.0
    %1279 = vmatpush1.msra.mxu0 %v68
    %1280 = vmatprep.subr.mxu0 0.0
    %1281 = vmatpush1.msra.mxu0 %v69
    %1282 = vmatprep.subr.mxu0 0.0
    %1283 = vmatpush1.msra.mxu0 %v70
    %1284 = vmatprep.subr.mxu0 0.0
    %1285 = vmatpush1.msra.mxu0 0.0
    %1286 = vmatprep.subr.mxu0 0.0
    %1287 = vmatpush1.msra.mxu0 0.0
    %1288 = vmatprep.subr.mxu0 0.0
    %1289 = vmatpush1.msra.mxu0 0.0
    %1290 = vmatprep.subr.mxu0 0.0
    %1291 = vmatpush1.msra.mxu0 0.0
    %1292 = vmatprep.subr.mxu0 0.0
    %1293 = vmatpush1.msra.mxu0 0.0
    %1294 = vmatprep.subr.mxu0 0.0
    %1295 = vmatpush1.msra.mxu0 0.0
    %1296 = vmatprep.subr.mxu0 0.0
    %1297 = vmatpush1.msra.mxu0 0.0
    %1298 = vmatprep.subr.mxu0 0.0
    %1299 = vmatpush1.msra.mxu0 0.0
    %1300 = vmatprep.subr.mxu0 0.0
    %1301 = vmatpush1.msra.mxu0 0.0
    %1302 = vmatprep.subr.mxu0 0.0
    %1303 = vmatpush1.msra.mxu0 0.0
    %1304 = vmatprep.subr.mxu0 0.0
    %1305 = vmatpush1.msra.mxu0 0.0
    %1306 = vmatprep.subr.mxu0 0.0
    %1307 = vmatpush1.msra.mxu0 0.0
    %1308 = vmatprep.subr.mxu0 0.0
    %1309 = vmatpush1.msra.mxu0 0.0
    %1310 = vmatprep.subr.mxu0 0.0
    %1311 = vmatpush1.msra.mxu0 0.0
    %1312 = vmatprep.subr.mxu0 0.0
    %1313 = vmatpush1.msra.mxu0 0.0
    %1314 = vmatprep.subr.mxu0 0.0
    %1315 = vmatpush1.msra.mxu0 0.0
    %1316 = vmatprep.subr.mxu0 0.0
    %1317 = vmatpush1.msra.mxu0 0.0
    %1318 = vmatprep.subr.mxu0 0.0
    %1319 = vmatpush1.msra.mxu0 0.0
    %1320 = vmatprep.subr.mxu0 0.0
    %1321 = vmatpush1.msra.mxu0 0.0
    %1322 = vmatprep.subr.mxu0 0.0
    %1323 = vmatpush1.msra.mxu0 0.0
    %1324 = vmatprep.subr.mxu0 0.0
    %1325 = vmatpush1.msra.mxu0 0.0
    %1326 = vmatprep.subr.mxu0 0.0
    %1327 = vmatpush1.msra.mxu0 0.0
    %1328 = vmatprep.subr.mxu0 0.0
    %1329 = vmatpush1.msra.mxu0 0.0
    %1330 = vmatprep.subr.mxu0 0.0
    %1331 = vmatpush1.msra.mxu0 0.0
    %1332 = vmatprep.mubr.f32.mxu0 0.0
    %1333 = vmatmul.mubr.f32.gmra.mrb[0].mxu0 %v1263
    %v1334 = vpop.f32.mrb[0].mxu0
    %v1335 = vadd.f32 %v429, %v1334
    %v1336 = vpop.f32.mrb[0].mxu0
    %1337 = vmatprep.mubr.f32.mxu0 0.0
    %1338 = vmatmul.mubr.f32.gmra.mrb[0].mxu0 %v1266
    %v1339 = vpop.f32.mrb[0].mxu0
    %v1340 = vadd.f32 %v429, %v1339
    %v1341 = vpop.f32.mrb[0].mxu0
    %1342 = vdwg.mxu0
    %v1343 = vtanh.pop %v1335
    %v1344 = vtanh.pop %v1340
    %v1345 = vld [vmem:[%s1] sm:$0xff]
    %v1346 = vld [vmem:[%s1 + $0x8] sm:$0xff]
    %1347 = vxpose.xlu0.b32.start [1/16] %v1345, 128
    %1348 = vxpose.xlu0.b32.cont [2/16] 0.0, 128
    %1349 = vxpose.xlu0.b32.cont [3/16] 0.0, 128
    %1350 = vxpose.xlu0.b32.cont [4/16] 0.0, 128
    %1351 = vxpose.xlu0.b32.cont [5/16] 0.0, 128
    %1352 = vxpose.xlu0.b32.cont [6/16] 0.0, 128
    %1353 = vxpose.xlu0.b32.cont [7/16] 0.0, 128
    %1354 = vxpose.xlu0.b32.cont [8/16] 0.0, 128
    %1355 = vxpose.xlu0.b32.cont [9/16] 0.0, 128
    %1356 = vxpose.xlu0.b32.cont [10/16] 0.0, 128
    %1357 = vxpose.xlu0.b32.cont [11/16] 0.0, 128
    %1358 = vxpose.xlu0.b32.cont [12/16] 0.0, 128
    %1359 = vxpose.xlu0.b32.cont [13/16] 0.0, 128
    %1360 = vxpose.xlu0.b32.cont [14/16] 0.0, 128
    %1361 = vxpose.xlu0.b32.cont [15/16] 0.0, 128
    %1362 = vxpose.xlu0.b32.end [16/16] 0.0, 128
    %v1363 = vpop.trf.xlu0
    %v1364 = vpop.trf.xlu0
    %v1365 = vpop.trf.xlu0
    %v1366 = vpop.trf.xlu0
    %v1367 = vpop.trf.xlu0
    %v1368 = vpop.trf.xlu0
    %v1369 = vpop.trf.xlu0
    %v1370 = vpop.trf.xlu0
    %v1371 = vpop.trf.xlu0
    %v1372 = vpop.trf.xlu0
    %v1373 = vpop.trf.xlu0
    %v1374 = vpop.trf.xlu0
    %v1375 = vpop.trf.xlu0
    %v1376 = vpop.trf.xlu0
    %v1377 = vpop.trf.xlu0
    %v1378 = vpop.trf.xlu0
    %1379 = vxpose.xlu0.b32.start [1/16] %v1346, 128
    %1380 = vxpose.xlu0.b32.cont [2/16] 0.0, 128
    %1381 = vxpose.xlu0.b32.cont [3/16] 0.0, 128
    %1382 = vxpose.xlu0.b32.cont [4/16] 0.0, 128
    %1383 = vxpose.xlu0.b32.cont [5/16] 0.0, 128
    %1384 = vxpose.xlu0.b32.cont [6/16] 0.0, 128
    %1385 = vxpose.xlu0.b32.cont [7/16] 0.0, 128
    %1386 = vxpose.xlu0.b32.cont [8/16] 0.0, 128
    %1387 = vxpose.xlu0.b32.cont [9/16] 0.0, 128
    %1388 = vxpose.xlu0.b32.cont [10/16] 0.0, 128
    %1389 = vxpose.xlu0.b32.cont [11/16] 0.0, 128
    %1390 = vxpose.xlu0.b32.cont [12/16] 0.0, 128
    %1391 = vxpose.xlu0.b32.cont [13/16] 0.0, 128
    %1392 = vxpose.xlu0.b32.cont [14/16] 0.0, 128
    %1393 = vxpose.xlu0.b32.cont [15/16] 0.0, 128
    %1394 = vxpose.xlu0.b32.end [16/16] 0.0, 128
    %v1395 = vpop.trf.xlu0
    %v1396 = vpop.trf.xlu0
    %v1397 = vpop.trf.xlu0
    %v1398 = vpop.trf.xlu0
    %v1399 = vpop.trf.xlu0
    %v1400 = vpop.trf.xlu0
    %v1401 = vpop.trf.xlu0
    %v1402 = vpop.trf.xlu0
    %v1403 = vpop.trf.xlu0
    %v1404 = vpop.trf.xlu0
    %v1405 = vpop.trf.xlu0
    %v1406 = vpop.trf.xlu0
    %v1407 = vpop.trf.xlu0
    %v1408 = vpop.trf.xlu0
    %v1409 = vpop.trf.xlu0
    %v1410 = vpop.trf.xlu0
    %v1412 = vsel %vm151, %v1345, 0
    %v1415 = vsel %vm151, %v1346, 0
    %1417 = vmatprep.subr.mxu0 0.0
    %1418 = vmatpush1.msra.mxu0 %v52
    %1419 = vmatprep.subr.mxu0 0.0
    %1420 = vmatpush1.msra.mxu0 0.0
    %1421 = vmatprep.subr.mxu0 0.0
    %1422 = vmatpush1.msra.mxu0 0.0
    %1423 = vmatprep.subr.mxu0 0.0
    %1424 = vmatpush1.msra.mxu0 0.0
    %1425 = vmatprep.subr.mxu0 0.0
    %1426 = vmatpush1.msra.mxu0 0.0
    %1427 = vmatprep.subr.mxu0 0.0
    %1428 = vmatpush1.msra.mxu0 0.0
    %1429 = vmatprep.subr.mxu0 0.0
    %1430 = vmatpush1.msra.mxu0 0.0
    %1431 = vmatprep.subr.mxu0 0.0
    %1432 = vmatpush1.msra.mxu0 0.0
    %1433 = vmatprep.subr.mxu0 0.0
    %1434 = vmatpush1.msra.mxu0 0.0
    %1435 = vmatprep.subr.mxu0 0.0
    %1436 = vmatpush1.msra.mxu0 0.0
    %1437 = vmatprep.subr.mxu0 0.0
    %1438 = vmatpush1.msra.mxu0 0.0
    %1439 = vmatprep.subr.mxu0 0.0
    %1440 = vmatpush1.msra.mxu0 0.0
    %1441 = vmatprep.subr.mxu0 0.0
    %1442 = vmatpush1.msra.mxu0 0.0
    %1443 = vmatprep.subr.mxu0 0.0
    %1444 = vmatpush1.msra.mxu0 0.0
    %1445 = vmatprep.subr.mxu0 0.0
    %1446 = vmatpush1.msra.mxu0 0.0
    %1447 = vmatprep.subr.mxu0 0.0
    %1448 = vmatpush1.msra.mxu0 0.0
    %1449 = vmatprep.subr.mxu0 0.0
    %1450 = vmatpush1.msra.mxu0 0.0
    %1451 = vmatprep.subr.mxu0 0.0
    %1452 = vmatpush1.msra.mxu0 0.0
    %1453 = vmatprep.subr.mxu0 0.0
    %1454 = vmatpush1.msra.mxu0 0.0
    %1455 = vmatprep.subr.mxu0 0.0
    %1456 = vmatpush1.msra.mxu0 0.0
    %1457 = vmatprep.subr.mxu0 0.0
    %1458 = vmatpush1.msra.mxu0 0.0
    %1459 = vmatprep.subr.mxu0 0.0
    %1460 = vmatpush1.msra.mxu0 0.0
    %1461 = vmatprep.subr.mxu0 0.0
    %1462 = vmatpush1.msra.mxu0 0.0
    %1463 = vmatprep.subr.mxu0 0.0
    %1464 = vmatpush1.msra.mxu0 0.0
    %1465 = vmatprep.subr.mxu0 0.0
    %1466 = vmatpush1.msra.mxu0 0.0
    %1467 = vmatprep.subr.mxu0 0.0
    %1468 = vmatpush1.msra.mxu0 0.0
    %1469 = vmatprep.subr.mxu0 0.0
    %1470 = vmatpush1.msra.mxu0 0.0
    %1471 = vmatprep.subr.mxu0 0.0
    %1472 = vmatpush1.msra.mxu0 0.0
    %1473 = vmatprep.subr.mxu0 0.0
    %1474 = vmatpush1.msra.mxu0 0.0
    %1475 = vmatprep.subr.mxu0 0.0
    %1476 = vmatpush1.msra.mxu0 0.0
    %1477 = vmatprep.subr.mxu0 0.0
    %1478 = vmatpush1.msra.mxu0 0.0
    %1479 = vmatprep.subr.mxu0 0.0
    %1480 = vmatpush1.msra.mxu0 0.0
    %1481 = vmatprep.mubr.f32.mxu0 0.0
    %1482 = vmatmul.mubr.f32.gmra.mrb[0].mxu0 %v1412
    %v1483 = vpop.f32.mrb[0].mxu0
    %v1484 = vadd.f32 0.0, %v1483
    %v1485 = vpop.f32.mrb[0].mxu0
    %1486 = vmatprep.mubr.f32.mxu0 0.0
    %1487 = vmatmul.mubr.f32.gmra.mrb[0].mxu0 %v1415
    %v1488 = vpop.f32.mrb[0].mxu0
    %v1489 = vadd.f32 0.0, %v1488
    %v1490 = vpop.f32.mrb[0].mxu0
    %1491 = vdwg.mxu0
    %v1493 = vsel %vm151, %v1363, 0
    %v1496 = vsel %vm151, %v1395, 0
    %1498 = vmatprep.subr.mxu0 0.0
    %1499 = vmatpush1.msra.mxu0 %v52
    %1500 = vmatprep.subr.mxu0 0.0
    %1501 = vmatpush1.msra.mxu0 0.0
    %1502 = vmatprep.subr.mxu0 0.0
    %1503 = vmatpush1.msra.mxu0 0.0
    %1504 = vmatprep.subr.mxu0 0.0
    %1505 = vmatpush1.msra.mxu0 0.0
    %1506 = vmatprep.subr.mxu0 0.0
    %1507 = vmatpush1.msra.mxu0 0.0
    %1508 = vmatprep.subr.mxu0 0.0
    %1509 = vmatpush1.msra.mxu0 0.0
    %1510 = vmatprep.subr.mxu0 0.0
    %1511 = vmatpush1.msra.mxu0 0.0
    %1512 = vmatprep.subr.mxu0 0.0
    %1513 = vmatpush1.msra.mxu0 0.0
    %1514 = vmatprep.subr.mxu0 0.0
    %1515 = vmatpush1.msra.mxu0 0.0
    %1516 = vmatprep.subr.mxu0 0.0
    %1517 = vmatpush1.msra.mxu0 0.0
    %1518 = vmatprep.subr.mxu0 0.0
    %1519 = vmatpush1.msra.mxu0 0.0
    %1520 = vmatprep.subr.mxu0 0.0
    %1521 = vmatpush1.msra.mxu0 0.0
    %1522 = vmatprep.subr.mxu0 0.0
    %1523 = vmatpush1.msra.mxu0 0.0
    %1524 = vmatprep.subr.mxu0 0.0
    %1525 = vmatpush1.msra.mxu0 0.0
    %1526 = vmatprep.subr.mxu0 0.0
    %1527 = vmatpush1.msra.mxu0 0.0
    %1528 = vmatprep.subr.mxu0 0.0
    %1529 = vmatpush1.msra.mxu0 0.0
    %1530 = vmatprep.subr.mxu0 0.0
    %1531 = vmatpush1.msra.mxu0 0.0
    %1532 = vmatprep.subr.mxu0 0.0
    %1533 = vmatpush1.msra.mxu0 0.0
    %1534 = vmatprep.subr.mxu0 0.0
    %1535 = vmatpush1.msra.mxu0 0.0
    %1536 = vmatprep.subr.mxu0 0.0
    %1537 = vmatpush1.msra.mxu0 0.0
    %1538 = vmatprep.subr.mxu0 0.0
    %1539 = vmatpush1.msra.mxu0 0.0
    %1540 = vmatprep.subr.mxu0 0.0
    %1541 = vmatpush1.msra.mxu0 0.0
    %1542 = vmatprep.subr.mxu0 0.0
    %1543 = vmatpush1.msra.mxu0 0.0
    %1544 = vmatprep.subr.mxu0 0.0
    %1545 = vmatpush1.msra.mxu0 0.0
    %1546 = vmatprep.subr.mxu0 0.0
    %1547 = vmatpush1.msra.mxu0 0.0
    %1548 = vmatprep.subr.mxu0 0.0
    %1549 = vmatpush1.msra.mxu0 0.0
    %1550 = vmatprep.subr.mxu0 0.0
    %1551 = vmatpush1.msra.mxu0 0.0
    %1552 = vmatprep.subr.mxu0 0.0
    %1553 = vmatpush1.msra.mxu0 0.0
    %1554 = vmatprep.subr.mxu0 0.0
    %1555 = vmatpush1.msra.mxu0 0.0
    %1556 = vmatprep.subr.mxu0 0.0
    %1557 = vmatpush1.msra.mxu0 0.0
    %1558 = vmatprep.subr.mxu0 0.0
    %1559 = vmatpush1.msra.mxu0 0.0
    %1560 = vmatprep.subr.mxu0 0.0
    %1561 = vmatpush1.msra.mxu0 0.0
    %1562 = vmatprep.mubr.f32.mxu0 0.0
    %1563 = vmatmul.mubr.f32.gmra.mrb[0].mxu0 %v1493
    %v1564 = vpop.f32.mrb[0].mxu0
    %v1565 = vadd.f32 0.0, %v1564
    %v1566 = vpop.f32.mrb[0].mxu0
    %1567 = vmatprep.mubr.f32.mxu0 0.0
    %1568 = vmatmul.mubr.f32.gmra.mrb[0].mxu0 %v1496
    %v1569 = vpop.f32.mrb[0].mxu0
    %v1570 = vadd.f32 0.0, %v1569
    %v1571 = vpop.f32.mrb[0].mxu0
    %1572 = vdwg.mxu0
    %1575 = vrot.lane.b32.xlu0 %v1565, 16
    %v1576 = vpop.permute.xlu0 %1575
    %1577 = vrot.lane.b32.xlu0 %v1570, 16
    %v1578 = vpop.permute.xlu0 %1577
    %v1581 = vsel %vm322, %v1484, %v1576
    %v1582 = vsel %vm322, %v1489, %v1578
    %v1584 = vlaneseq
    %v1585 = vshrl.u32 %v1584, 7
    %v1586 = vsub.s32 0, %v1585
    %v1587 = vrot.slane %v62, %v1586
    %v1590 = vsel %vm331, %v1581, 0
    %v1593 = vsel %vm331, %v1582, 0
    %1595 = vmatprep.subr.mxu0 0.0
    %1596 = vmatpush1.msra.mxu0 %v58
    %1597 = vmatprep.subr.mxu0 0.0
    %1598 = vmatpush1.msra.mxu0 %v59
    %1599 = vmatprep.subr.mxu0 0.0
    %1600 = vmatpush1.msra.mxu0 %v60
    %1601 = vmatprep.subr.mxu0 0.0
    %1602 = vmatpush1.msra.mxu0 %v61
    %1603 = vmatprep.subr.mxu0 0.0
    %1604 = vmatpush1.msra.mxu0 0.0
    %1605 = vmatprep.subr.mxu0 0.0
    %1606 = vmatpush1.msra.mxu0 0.0
    %1607 = vmatprep.subr.mxu0 0.0
    %1608 = vmatpush1.msra.mxu0 0.0
    %1609 = vmatprep.subr.mxu0 0.0
    %1610 = vmatpush1.msra.mxu0 0.0
    %1611 = vmatprep.subr.mxu0 0.0
    %1612 = vmatpush1.msra.mxu0 0.0
    %1613 = vmatprep.subr.mxu0 0.0
    %1614 = vmatpush1.msra.mxu0 0.0
    %1615 = vmatprep.subr.mxu0 0.0
    %1616 = vmatpush1.msra.mxu0 0.0
    %1617 = vmatprep.subr.mxu0 0.0
    %1618 = vmatpush1.msra.mxu0 0.0
    %1619 = vmatprep.subr.mxu0 0.0
    %1620 = vmatpush1.msra.mxu0 0.0
    %1621 = vmatprep.subr.mxu0 0.0
    %1622 = vmatpush1.msra.mxu0 0.0
    %1623 = vmatprep.subr.mxu0 0.0
    %1624 = vmatpush1.msra.mxu0 0.0
    %1625 = vmatprep.subr.mxu0 0.0
    %1626 = vmatpush1.msra.mxu0 0.0
    %1627 = vmatprep.subr.mxu0 0.0
    %1628 = vmatpush1.msra.mxu0 0.0
    %1629 = vmatprep.subr.mxu0 0.0
    %1630 = vmatpush1.msra.mxu0 0.0
    %1631 = vmatprep.subr.mxu0 0.0
    %1632 = vmatpush1.msra.mxu0 0.0
    %1633 = vmatprep.subr.mxu0 0.0
    %1634 = vmatpush1.msra.mxu0 0.0
    %1635 = vmatprep.subr.mxu0 0.0
    %1636 = vmatpush1.msra.mxu0 0.0
    %1637 = vmatprep.subr.mxu0 0.0
    %1638 = vmatpush1.msra.mxu0 0.0
    %1639 = vmatprep.subr.mxu0 0.0
    %1640 = vmatpush1.msra.mxu0 0.0
    %1641 = vmatprep.subr.mxu0 0.0
    %1642 = vmatpush1.msra.mxu0 0.0
    %1643 = vmatprep.subr.mxu0 0.0
    %1644 = vmatpush1.msra.mxu0 0.0
    %1645 = vmatprep.subr.mxu0 0.0
    %1646 = vmatpush1.msra.mxu0 0.0
    %1647 = vmatprep.subr.mxu0 0.0
    %1648 = vmatpush1.msra.mxu0 0.0
    %1649 = vmatprep.subr.mxu0 0.0
    %1650 = vmatpush1.msra.mxu0 0.0
    %1651 = vmatprep.subr.mxu0 0.0
    %1652 = vmatpush1.msra.mxu0 0.0
    %1653 = vmatprep.subr.mxu0 0.0
    %1654 = vmatpush1.msra.mxu0 0.0
    %1655 = vmatprep.subr.mxu0 0.0
    %1656 = vmatpush1.msra.mxu0 0.0
    %1657 = vmatprep.subr.mxu0 0.0
    %1658 = vmatpush1.msra.mxu0 0.0
    %1659 = vmatprep.mubr.f32.mxu0 0.0
    %1660 = vmatmul.mubr.f32.gmra.mrb[0].mxu0 %v1590
    %v1661 = vpop.f32.mrb[0].mxu0
    %v1662 = vadd.f32 %v1587, %v1661
    %v1663 = vpop.f32.mrb[0].mxu0
    %1664 = vmatprep.mubr.f32.mxu0 0.0
    %1665 = vmatmul.mubr.f32.gmra.mrb[0].mxu0 %v1593
    %v1666 = vpop.f32.mrb[0].mxu0
    %v1667 = vadd.f32 %v1587, %v1666
    %v1668 = vpop.f32.mrb[0].mxu0
    %1669 = vdwg.mxu0
    %v1670 = vtanh.pop %v1662
    %v1671 = vtanh.pop %v1667
    %1674 = vrot.lane.b32.xlu0 %v1670, 32
    %v1675 = vpop.permute.xlu0 %1674
    %1676 = vrot.lane.b32.xlu0 %v1671, 32
    %v1677 = vpop.permute.xlu0 %1676
    %v1680 = vsel %vm331, %v1343, %v1675
    %v1681 = vsel %vm331, %v1344, %v1677
    %v1683 = vlaneseq
    %v1684 = vshrl.u32 %v1683, 7
    %v1685 = vsub.s32 0, %v1684
    %v1686 = vrot.slane %v80, %v1685
    %v1689 = vsel %vm431, %v1680, 0
    %v1692 = vsel %vm431, %v1681, 0
    %1694 = vmatprep.subr.mxu0 0.0
    %1695 = vmatpush1.msra.mxu0 %v72
    %1696 = vmatprep.subr.mxu0 0.0
    %1697 = vmatpush1.msra.mxu0 %v73
    %1698 = vmatprep.subr.mxu0 0.0
    %1699 = vmatpush1.msra.mxu0 %v74
    %1700 = vmatprep.subr.mxu0 0.0
    %1701 = vmatpush1.msra.mxu0 %v75
    %1702 = vmatprep.subr.mxu0 0.0
    %1703 = vmatpush1.msra.mxu0 %v76
    %1704 = vmatprep.subr.mxu0 0.0
    %1705 = vmatpush1.msra.mxu0 %v77
    %1706 = vmatprep.subr.mxu0 0.0
    %1707 = vmatpush1.msra.mxu0 %v78
    %1708 = vmatprep.subr.mxu0 0.0
    %1709 = vmatpush1.msra.mxu0 %v79
    %1710 = vmatprep.subr.mxu0 0.0
    %1711 = vmatpush1.msra.mxu0 0.0
    %1712 = vmatprep.subr.mxu0 0.0
    %1713 = vmatpush1.msra.mxu0 0.0
    %1714 = vmatprep.subr.mxu0 0.0
    %1715 = vmatpush1.msra.mxu0 0.0
    %1716 = vmatprep.subr.mxu0 0.0
    %1717 = vmatpush1.msra.mxu0 0.0
    %1718 = vmatprep.subr.mxu0 0.0
    %1719 = vmatpush1.msra.mxu0 0.0
    %1720 = vmatprep.subr.mxu0 0.0
    %1721 = vmatpush1.msra.mxu0 0.0
    %1722 = vmatprep.subr.mxu0 0.0
    %1723 = vmatpush1.msra.mxu0 0.0
    %1724 = vmatprep.subr.mxu0 0.0
    %1725 = vmatpush1.msra.mxu0 0.0
    %1726 = vmatprep.subr.mxu0 0.0
    %1727 = vmatpush1.msra.mxu0 0.0
    %1728 = vmatprep.subr.mxu0 0.0
    %1729 = vmatpush1.msra.mxu0 0.0
    %1730 = vmatprep.subr.mxu0 0.0
    %1731 = vmatpush1.msra.mxu0 0.0
    %1732 = vmatprep.subr.mxu0 0.0
    %1733 = vmatpush1.msra.mxu0 0.0
    %1734 = vmatprep.subr.mxu0 0.0
    %1735 = vmatpush1.msra.mxu0 0.0
    %1736 = vmatprep.subr.mxu0 0.0
    %1737 = vmatpush1.msra.mxu0 0.0
    %1738 = vmatprep.subr.mxu0 0.0
    %1739 = vmatpush1.msra.mxu0 0.0
    %1740 = vmatprep.subr.mxu0 0.0
    %1741 = vmatpush1.msra.mxu0 0.0
    %1742 = vmatprep.subr.mxu0 0.0
    %1743 = vmatpush1.msra.mxu0 0.0
    %1744 = vmatprep.subr.mxu0 0.0
    %1745 = vmatpush1.msra.mxu0 0.0
    %1746 = vmatprep.subr.mxu0 0.0
    %1747 = vmatpush1.msra.mxu0 0.0
    %1748 = vmatprep.subr.mxu0 0.0
    %1749 = vmatpush1.msra.mxu0 0.0
    %1750 = vmatprep.subr.mxu0 0.0
    %1751 = vmatpush1.msra.mxu0 0.0
    %1752 = vmatprep.subr.mxu0 0.0
    %1753 = vmatpush1.msra.mxu0 0.0
    %1754 = vmatprep.subr.mxu0 0.0
    %1755 = vmatpush1.msra.mxu0 0.0
    %1756 = vmatprep.subr.mxu0 0.0
    %1757 = vmatpush1.msra.mxu0 0.0
    %1758 = vmatprep.mubr.f32.mxu0 0.0
    %1759 = vmatmul.mubr.f32.gmra.mrb[0].mxu0 %v1689
    %v1760 = vpop.f32.mrb[0].mxu0
    %v1761 = vadd.f32 %v1686, %v1760
    %v1762 = vpop.f32.mrb[0].mxu0
    %1763 = vmatprep.mubr.f32.mxu0 0.0
    %1764 = vmatmul.mubr.f32.gmra.mrb[0].mxu0 %v1692
    %v1765 = vpop.f32.mrb[0].mxu0
    %v1766 = vadd.f32 %v1686, %v1765
    %v1767 = vpop.f32.mrb[0].mxu0
    %1768 = vdwg.mxu0
    %v1769 = vsel %vm151, %v1761, 0.0
    %1770 = vadd.xlane.f32.xlu0 %v1769
    %v1771 = vpop.xlane.xlu0 %1770
    %v1772 = vsel %vm151, %v1766, 0.0
    %1773 = vadd.xlane.f32.xlu0 %v1772
    %v1774 = vpop.xlane.xlu0 %1773
    %v1775 = vrcp.pop 8.0
    %v1776 = vmul.f32 %v1771, %v1775
    %v1777 = vmul.f32 %v1774, %v1775
    %v1778 = vsub.f32 %v1761, %v1776
    %v1779 = vsub.f32 %v1766, %v1777
    %v1780 = vmul.f32 %v1778, %v1778
    %v1781 = vmul.f32 %v1779, %v1779
    %v1782 = vsel %vm151, %v1780, 0.0
    %1783 = vadd.xlane.f32.xlu0 %v1782
    %v1784 = vpop.xlane.xlu0 %1783
    %v1785 = vsel %vm151, %v1781, 0.0
    %1786 = vadd.xlane.f32.xlu0 %v1785
    %v1787 = vpop.xlane.xlu0 %1786
    %v1788 = vmul.f32 %v1784, %v1775
    %v1789 = vmul.f32 %v1787, %v1775
    %v1790 = vadd.f32 %v1788, 1e-05
    %v1791 = vadd.f32 %v1789, 1e-05
    %v1792 = vrsqrt.pop %v1790
    %v1793 = vrsqrt.pop %v1791
    %v1794 = vmul.f32 %v1778, %v1792
    %v1795 = vmul.f32 %v1779, %v1793
    %v1797 = vlaneseq
    %v1798 = vshrl.u32 %v1797, 7
    %v1799 = vsub.s32 0, %v1798
    %v1800 = vrot.slane %v81, %v1799
    %v1802 = vmul.f32 %v1794, %v1800
    %v1803 = vmul.f32 %v1795, %v1800
    %v1805 = vlaneseq
    %v1806 = vshrl.u32 %v1805, 7
    %v1807 = vsub.s32 0, %v1806
    %v1808 = vrot.slane %v82, %v1807
    %v1810 = vadd.f32 %v1802, %v1808
    %v1811 = vadd.f32 %v1803, %v1808
    %1814 = vrot.lane.b32.xlu0 %v1761, 120
    %v1815 = vpop.permute.xlu0 %1814
    %1816 = vrot.lane.b32.xlu0 %v1766, 120
    %v1817 = vpop.permute.xlu0 %1816
    %v1820 = vsel %vm151, %v1815, 0.0
    %1821 = vadd.xlane.f32.xlu0 %v1820
    %v1822 = vpop.xlane.xlu0 %1821
    %v1823 = vsel %vm151, %v1817, 0.0
    %1824 = vadd.xlane.f32.xlu0 %v1823
    %v1825 = vpop.xlane.xlu0 %1824
    %v1826 = vmul.f32 %v1822, %v1775
    %v1827 = vmul.f32 %v1825, %v1775
    %v1828 = vsub.f32 %v1761, %v1826
    %v1829 = vsub.f32 %v1766, %v1827
    %v1830 = vmul.f32 %v1828, %v1828
    %v1831 = vmul.f32 %v1829, %v1829
    %1834 = vrot.lane.b32.xlu0 %v1830, 120
    %v1835 = vpop.permute.xlu0 %1834
    %1836 = vrot.lane.b32.xlu0 %v1831, 120
    %v1837 = vpop.permute.xlu0 %1836
    %v1840 = vsel %vm151, %v1835, 0.0
    %1841 = vadd.xlane.f32.xlu0 %v1840
    %v1842 = vpop.xlane.xlu0 %1841
    %v1843 = vsel %vm151, %v1837, 0.0
    %1844 = vadd.xlane.f32.xlu0 %v1843
    %v1845 = vpop.xlane.xlu0 %1844
    %v1846 = vmul.f32 %v1842, %v1775
    %v1847 = vmul.f32 %v1845, %v1775
    %v1848 = vadd.f32 %v1846, 1e-05
    %v1849 = vadd.f32 %v1847, 1e-05
    %v1850 = vrsqrt.pop %v1848
    %v1851 = vrsqrt.pop %v1849
    %v1852 = vmul.f32 %v1828, %v1850
    %v1853 = vmul.f32 %v1829, %v1851
    %v1854 = vmul.f32 %v1852, %v1800
    %v1855 = vmul.f32 %v1853, %v1800
    %v1856 = vadd.f32 %v1854, %v1808
    %v1857 = vadd.f32 %v1855, %v1808
    %1859 = vrot.lane.b32.xlu0 %v1856, 120
    %v1860 = vpop.permute.xlu0 %1859
    %v1862 = vsel %vm151, %v1810, 0
    %v1864 = vsel %vm151, %v1860, 0
    %1866 = vmatprep.subr.mxu0 0.0
    %1867 = vmatpush1.xpose.msra.mxu0 %v1864
    %1868 = vmatprep.subr.mxu0 0.0
    %1869 = vmatpush1.xpose.msra.mxu0 0.0
    %1870 = vmatprep.subr.mxu0 0.0
    %1871 = vmatpush1.xpose.msra.mxu0 0.0
    %1872 = vmatprep.subr.mxu0 0.0
    %1873 = vmatpush1.xpose.msra.mxu0 0.0
    %1874 = vmatprep.subr.mxu0 0.0
    %1875 = vmatpush1.xpose.msra.mxu0 0.0
    %1876 = vmatprep.subr.mxu0 0.0
    %1877 = vmatpush1.xpose.msra.mxu0 0.0
    %1878 = vmatprep.subr.mxu0 0.0
    %1879 = vmatpush1.xpose.msra.mxu0 0.0
    %1880 = vmatprep.subr.mxu0 0.0
    %1881 = vmatpush1.xpose.msra.mxu0 0.0
    %1882 = vmatprep.subr.mxu0 0.0
    %1883 = vmatpush1.xpose.msra.mxu0 0.0
    %1884 = vmatprep.subr.mxu0 0.0
    %1885 = vmatpush1.xpose.msra.mxu0 0.0
    %1886 = vmatprep.subr.mxu0 0.0
    %1887 = vmatpush1.xpose.msra.mxu0 0.0
    %1888 = vmatprep.subr.mxu0 0.0
    %1889 = vmatpush1.xpose.msra.mxu0 0.0
    %1890 = vmatprep.subr.mxu0 0.0
    %1891 = vmatpush1.xpose.msra.mxu0 0.0
    %1892 = vmatprep.subr.mxu0 0.0
    %1893 = vmatpush1.xpose.msra.mxu0 0.0
    %1894 = vmatprep.subr.mxu0 0.0
    %1895 = vmatpush1.xpose.msra.mxu0 0.0
    %1896 = vmatprep.subr.mxu0 0.0
    %1897 = vmatpush1.xpose.msra.mxu0 0.0
    %1898 = vmatprep.subr.mxu0 0.0
    %1899 = vmatpush1.xpose.msra.mxu0 0.0
    %1900 = vmatprep.subr.mxu0 0.0
    %1901 = vmatpush1.xpose.msra.mxu0 0.0
    %1902 = vmatprep.subr.mxu0 0.0
    %1903 = vmatpush1.xpose.msra.mxu0 0.0
    %1904 = vmatprep.subr.mxu0 0.0
    %1905 = vmatpush1.xpose.msra.mxu0 0.0
    %1906 = vmatprep.subr.mxu0 0.0
    %1907 = vmatpush1.xpose.msra.mxu0 0.0
    %1908 = vmatprep.subr.mxu0 0.0
    %1909 = vmatpush1.xpose.msra.mxu0 0.0
    %1910 = vmatprep.subr.mxu0 0.0
    %1911 = vmatpush1.xpose.msra.mxu0 0.0
    %1912 = vmatprep.subr.mxu0 0.0
    %1913 = vmatpush1.xpose.msra.mxu0 0.0
    %1914 = vmatprep.subr.mxu0 0.0
    %1915 = vmatpush1.xpose.msra.mxu0 0.0
    %1916 = vmatprep.subr.mxu0 0.0
    %1917 = vmatpush1.xpose.msra.mxu0 0.0
    %1918 = vmatprep.subr.mxu0 0.0
    %1919 = vmatpush1.xpose.msra.mxu0 0.0
    %1920 = vmatprep.subr.mxu0 0.0
    %1921 = vmatpush1.xpose.msra.mxu0 0.0
    %1922 = vmatprep.subr.mxu0 0.0
    %1923 = vmatpush1.xpose.msra.mxu0 0.0
    %1924 = vmatprep.subr.mxu0 0.0
    %1925 = vmatpush1.xpose.msra.mxu0 0.0
    %1926 = vmatprep.subr.mxu0 0.0
    %1927 = vmatpush1.xpose.msra.mxu0 0.0
    %1928 = vmatprep.subr.mxu0 0.0
    %1929 = vmatpush1.xpose.msra.mxu0 0.0
    %1930 = vmatprep.mubr.f32.mxu0 0.0
    %1931 = vmatmul.mubr.f32.gmra.mrb[0].mxu0 %v1862
    %v1932 = vpop.f32.mrb[0].mxu0
    %v1933 = vadd.f32 0.0, %v1932
    %v1934 = vpop.f32.mrb[0].mxu0
    %1935 = vdwg.mxu0
    %v1936 = vxor.u32 %v1933, 2147483648
    %v1937 = vmul.f32 %v1936, 1.442695
    %v1938 = vpow.pop %v1937
    %v1939 = vadd.f32 %v1938, 1.0
    %v1940 = vrcp.pop %v1939
    %v1941 = vmul.f32 1.0, %v1940
    %1942 = vst.msk [vmem:[#allocation2] sm:$0xff] %vm151, %v1941
    %1944 = vrot.lane.b32.xlu0 %v1857, 120
    %v1945 = vpop.permute.xlu0 %1944
    %v1947 = vsel %vm151, %v1811, 0
    %v1949 = vsel %vm151, %v1945, 0
    %1951 = vmatprep.subr.mxu0 0.0
    %1952 = vmatpush1.xpose.msra.mxu0 %v1949
    %1953 = vmatprep.subr.mxu0 0.0
    %1954 = vmatpush1.xpose.msra.mxu0 0.0
    %1955 = vmatprep.subr.mxu0 0.0
    %1956 = vmatpush1.xpose.msra.mxu0 0.0
    %1957 = vmatprep.subr.mxu0 0.0
    %1958 = vmatpush1.xpose.msra.mxu0 0.0
    %1959 = vmatprep.subr.mxu0 0.0
    %1960 = vmatpush1.xpose.msra.mxu0 0.0
    %1961 = vmatprep.subr.mxu0 0.0
    %1962 = vmatpush1.xpose.msra.mxu0 0.0
    %1963 = vmatprep.subr.mxu0 0.0
    %1964 = vmatpush1.xpose.msra.mxu0 0.0
    %1965 = vmatprep.subr.mxu0 0.0
    %1966 = vmatpush1.xpose.msra.mxu0 0.0
    %1967 = vmatprep.subr.mxu0 0.0
    %1968 = vmatpush1.xpose.msra.mxu0 0.0
    %1969 = vmatprep.subr.mxu0 0.0
    %1970 = vmatpush1.xpose.msra.mxu0 0.0
    %1971 = vmatprep.subr.mxu0 0.0
    %1972 = vmatpush1.xpose.msra.mxu0 0.0
    %1973 = vmatprep.subr.mxu0 0.0
    %1974 = vmatpush1.xpose.msra.mxu0 0.0
    %1975 = vmatprep.subr.mxu0 0.0
    %1976 = vmatpush1.xpose.msra.mxu0 0.0
    %1977 = vmatprep.subr.mxu0 0.0
    %1978 = vmatpush1.xpose.msra.mxu0 0.0
    %1979 = vmatprep.subr.mxu0 0.0
    %1980 = vmatpush1.xpose.msra.mxu0 0.0
    %1981 = vmatprep.subr.mxu0 0.0
    %1982 = vmatpush1.xpose.msra.mxu0 0.0
    %1983 = vmatprep.subr.mxu0 0.0
    %1984 = vmatpush1.xpose.msra.mxu0 0.0
    %1985 = vmatprep.subr.mxu0 0.0
    %1986 = vmatpush1.xpose.msra.mxu0 0.0
    %1987 = vmatprep.subr.mxu0 0.0
    %1988 = vmatpush1.xpose.msra.mxu0 0.0
    %1989 = vmatprep.subr.mxu0 0.0
    %1990 = vmatpush1.xpose.msra.mxu0 0.0
    %1991 = vmatprep.subr.mxu0 0.0
    %1992 = vmatpush1.xpose.msra.mxu0 0.0
    %1993 = vmatprep.subr.mxu0 0.0
    %1994 = vmatpush1.xpose.msra.mxu0 0.0
    %1995 = vmatprep.subr.mxu0 0.0
    %1996 = vmatpush1.xpose.msra.mxu0 0.0
    %1997 = vmatprep.subr.mxu0 0.0
    %1998 = vmatpush1.xpose.msra.mxu0 0.0
    %1999 = vmatprep.subr.mxu0 0.0
    %2000 = vmatpush1.xpose.msra.mxu0 0.0
    %2001 = vmatprep.subr.mxu0 0.0
    %2002 = vmatpush1.xpose.msra.mxu0 0.0
    %2003 = vmatprep.subr.mxu0 0.0
    %2004 = vmatpush1.xpose.msra.mxu0 0.0
    %2005 = vmatprep.subr.mxu0 0.0
    %2006 = vmatpush1.xpose.msra.mxu0 0.0
    %2007 = vmatprep.subr.mxu0 0.0
    %2008 = vmatpush1.xpose.msra.mxu0 0.0
    %2009 = vmatprep.subr.mxu0 0.0
    %2010 = vmatpush1.xpose.msra.mxu0 0.0
    %2011 = vmatprep.subr.mxu0 0.0
    %2012 = vmatpush1.xpose.msra.mxu0 0.0
    %2013 = vmatprep.subr.mxu0 0.0
    %2014 = vmatpush1.xpose.msra.mxu0 0.0
    %2015 = vmatprep.mubr.f32.mxu0 0.0
    %2016 = vmatmul.mubr.f32.gmra.mrb[0].mxu0 %v1947
    %v2017 = vpop.f32.mrb[0].mxu0
    %v2018 = vadd.f32 0.0, %v2017
    %v2019 = vpop.f32.mrb[0].mxu0
    %2020 = vdwg.mxu0
    %v2021 = vxor.u32 %v2018, 2147483648
    %v2022 = vmul.f32 %v2021, 1.442695
    %v2023 = vpow.pop %v2022
    %v2024 = vadd.f32 %v2023, 1.0
    %v2025 = vrcp.pop %v2024
    %v2026 = vmul.f32 1.0, %v2025
    %s2027 = scalar_lea.vmem [#allocation2], 8
    %2028 = vst.msk [vmem:[%s2027] sm:$0xff] %vm151, %v2026
    // Predicated region
    $region62: #{resnmmf_forward.1} parent=1 // pred_check
      _
    $region63: #{resnmmf_forward.1} parent=1 // pred_check_branch
      %2030 = sbr.rel (0) target = $region65
    $region64: #{resnmmf_forward.1} parent=1 // pred_region
      %s2032 = ssub.s32 256, 256
      %2033 = vsyncadd [#allocation3], %s2032
      %s2034 = sshll.u32 [#allocation2], 4
      %s2035 = int_to_ptr.vmem [resolvable:$true] %s2034
      %2040 = dma.vmem_to_hbm [thread:$0]  %s2035, 256, %s15, [#allocation3], 128, 128, 8
    $region65: #{resnmmf_forward.1} parent=1 // pred_fallthru
      _
    // Predicated region
    $region66: #{resnmmf_forward.1} parent=1 // pred_check
      _
    $region67: #{resnmmf_forward.1} parent=1 // pred_check_branch
      %2042 = sbr.rel (0) target = $region69
    $region68: #{resnmmf_forward.1} parent=1 // pred_region
      %2043 = dma.done [#allocation3], 256
    $region69: #{resnmmf_forward.1} parent=1 // pred_fallthru
      _
    %2044 = vsyncpa [#allocation3], 1

</llo_original>
